<compile_context>
chip_gen: v6e
topology: v6e:2x2x1
jax: 0.10.0
libtpu: 0.0.40
codegen_flags: <defaults>
</compile_context>

<pallas_src>
import functools

import numpy as np
import jax
import jax.numpy as jnp
from jax.experimental import pallas as pl
from jax.experimental.pallas import tpu as pltpu

EPS = 1e-5
# Scoped VMEM limit: safe on v5e/v6e (128 MiB physical) and v7x (64 MiB physical).
VMEM_LIMIT = 40 * 1024 * 1024


# ----------------------- static spatial operator matrices ---------------------


def _adaptive_pool_matrix(p, L):
    """(p, L) row-stochastic matrix implementing AdaptiveAvgPool1d(L -> p)."""
    m = np.zeros((p, L), np.float32)
    for i in range(p):
        s = (i * L) // p
        e = -((-(i + 1) * L) // p)          # ceil((i+1)*L/p)
        m[i, s:e] = 1.0 / (e - s)
    return m


def _bilinear_matrix(L, p):
    """(L, p) matrix implementing bilinear upsample p -> L, align_corners=True."""
    m = np.zeros((L, p), np.float32)
    if p == 1:
        m[:, 0] = 1.0
        return m
    if L == 1:
        m[0, 0] = 1.0
        return m
    for o in range(L):
        pos = o * (p - 1) / (L - 1)
        i0 = min(int(np.floor(pos)), p - 2)
        f = pos - i0
        m[o, i0] += 1.0 - f
        m[o, i0 + 1] += f
    return m


def _build_spatial_mats(H, W, pool_sizes, kb):
    """P (HW, kb): adaptive-pool weights; R (HW, kb): bilinear-upsample weights.

    Bin axis is the concatenation of the p_i*p_i bins of every stage, padded
    with zero columns up to kb (a sublane-friendly multiple of 8).
    """
    HW = H * W
    P = np.zeros((HW, kb), np.float32)
    R = np.zeros((HW, kb), np.float32)
    off = 0
    for p in pool_sizes:
        Py, Px = _adaptive_pool_matrix(p, H), _adaptive_pool_matrix(p, W)
        Ry, Rx = _bilinear_matrix(H, p), _bilinear_matrix(W, p)
        P[:, off:off + p * p] = np.einsum("ah,bw->hwab", Py, Px).reshape(HW, p * p)
        R[:, off:off + p * p] = np.einsum("ha,wb->hwab", Ry, Rx).reshape(HW, p * p)
        off += p * p
    return jnp.asarray(P), jnp.asarray(R)


# -------------------------------- tile choice ----------------------------------


def _choose_tile(hw, row_bytes, budget=12 * 1024 * 1024):
    """Largest spatial tile (rows of the flattened H*W axis) that divides hw,
    is sublane-aligned (multiple of 8) and keeps the double-buffered working
    set under `budget` (sized conservatively for v7x's 64 MiB VMEM)."""
    cand = [c for c in (2048, 1024, 512, 256, 128, 64, 32, 16, 8)
            if c <= hw and hw % c == 0 and 2 * c * row_bytes <= budget]
    multi = [c for c in cand if c < hw]   # prefer >=2 tiles so DMA overlaps compute
    if multi:
        return multi[0]
    if cand:
        return cand[0]
    return hw                              # full-extent block (always legal)


# ---------------------------------- kernels ------------------------------------


def _pool_kernel(x_ref, p_ref, o_ref):
    # x: (1, tm, Cin)  p: (tm, KB)  o: (1, KB, Cin) resident accumulator per batch
    @pl.when(pl.program_id(1) == 0)
    def _():
        o_ref[...] = jnp.zeros_like(o_ref)

    acc = jax.lax.dot_general(                       # (KB, Cin) partial pools
        p_ref[...], x_ref[0], (((0,), (0,)), ((), ())),
        preferred_element_type=jnp.float32)
    o_ref[0] = o_ref[0] + acc


def _head_kernel(x_ref, r_ref, b_ref, w_ref, y_ref, ssum_ref, ssq_ref):
    # x: (1, tm, Cin)  r: (tm, KB)  b: (1, KB, Cout)  w: (Cin, Cout)
    # y: (1, tm, Cout) ; ssum/ssq: (1, 1, Cout) resident per-batch BN partials.
    y = (jnp.dot(x_ref[0], w_ref[...], preferred_element_type=jnp.float32)
         + jnp.dot(r_ref[...], b_ref[0], preferred_element_type=jnp.float32))
    y_ref[0] = y.astype(y_ref.dtype)

    @pl.when(pl.program_id(1) == 0)
    def _():
        ssum_ref[...] = jnp.zeros_like(ssum_ref)
        ssq_ref[...] = jnp.zeros_like(ssq_ref)

    ssum_ref[0] = ssum_ref[0] + jnp.sum(y, axis=0, keepdims=True)
    ssq_ref[0] = ssq_ref[0] + jnp.sum(y * y, axis=0, keepdims=True)


def _bn_relu_kernel(y_ref, sc_ref, sh_ref, o_ref):
    y = y_ref[0].astype(jnp.float32)
    o_ref[0] = jnp.maximum(y * sc_ref[...] + sh_ref[...], 0.0).astype(o_ref.dtype)


# ------------------------------- pallas wrappers --------------------------------


def _pool_all(x3, p_all, tm):
    N, HW, Cin = x3.shape
    KB = p_all.shape[1]
    return pl.pallas_call(
        _pool_kernel,
        grid=(N, HW // tm),
        in_specs=[
            pl.BlockSpec((1, tm, Cin), lambda n, t: (n, t, 0)),
            pl.BlockSpec((tm, KB), lambda n, t: (t, 0)),
        ],
        out_specs=pl.BlockSpec((1, KB, Cin), lambda n, t: (n, 0, 0)),
        out_shape=jax.ShapeDtypeStruct((N, KB, Cin), jnp.float32),
        compiler_params=pltpu.CompilerParams(
            dimension_semantics=("parallel", "arbitrary"),
            vmem_limit_bytes=VMEM_LIMIT),
    )(x3, p_all)


def _head_conv(x3, r_all, b_all, w_x, tm):
    N, HW, Cin = x3.shape
    KB = r_all.shape[1]
    Cout = w_x.shape[1]
    return pl.pallas_call(
        _head_kernel,
        grid=(N, HW // tm),
        in_specs=[
            pl.BlockSpec((1, tm, Cin), lambda n, t: (n, t, 0)),
            pl.BlockSpec((tm, KB), lambda n, t: (t, 0)),
            pl.BlockSpec((1, KB, Cout), lambda n, t: (n, 0, 0)),
            pl.BlockSpec((Cin, Cout), lambda n, t: (0, 0)),
        ],
        out_specs=[
            pl.BlockSpec((1, tm, Cout), lambda n, t: (n, t, 0)),
            pl.BlockSpec((1, 1, Cout), lambda n, t: (n, 0, 0)),
            pl.BlockSpec((1, 1, Cout), lambda n, t: (n, 0, 0)),
        ],
        out_shape=(
            jax.ShapeDtypeStruct((N, HW, Cout), jnp.float32),
            jax.ShapeDtypeStruct((N, 1, Cout), jnp.float32),
            jax.ShapeDtypeStruct((N, 1, Cout), jnp.float32),
        ),
        compiler_params=pltpu.CompilerParams(
            dimension_semantics=("parallel", "arbitrary"),
            vmem_limit_bytes=VMEM_LIMIT),
    )(x3, r_all, b_all, w_x)


def _bn_relu_apply(y_pre, scale, shift, tm, out_dtype):
    N, HW, Cout = y_pre.shape
    return pl.pallas_call(
        _bn_relu_kernel,
        grid=(N, HW // tm),
        in_specs=[
            pl.BlockSpec((1, tm, Cout), lambda n, t: (n, t, 0)),
            pl.BlockSpec((1, Cout), lambda n, t: (0, 0)),
            pl.BlockSpec((1, Cout), lambda n, t: (0, 0)),
        ],
        out_specs=pl.BlockSpec((1, tm, Cout), lambda n, t: (n, t, 0)),
        out_shape=jax.ShapeDtypeStruct((N, HW, Cout), out_dtype),
        compiler_params=pltpu.CompilerParams(
            dimension_semantics=("parallel", "parallel"),
            vmem_limit_bytes=VMEM_LIMIT),
    )(y_pre, scale, shift)


# ---------------------------------- module --------------------------------------


def init_ppm_params(key, in_channels, out_channels, pool_sizes):
    hid = in_channels // 4
    keys = jax.random.split(key, len(pool_sizes) + 3)

    def w_init(k, shape, fan_in):
        return jax.random.normal(k, shape, jnp.float32) / np.sqrt(fan_in)

    stage_w = [w_init(keys[i], (in_channels, hid), in_channels)
               for i in range(len(pool_sizes))]                        # 1x1 convs
    head_w = w_init(keys[-3], (2 * in_channels, out_channels), 2 * in_channels)
    gamma = 1.0 + 0.1 * jax.random.normal(keys[-2], (out_channels,), jnp.float32)
    beta = 0.1 * jax.random.normal(keys[-1], (out_channels,), jnp.float32)
    return {"stage_w": stage_w, "head_w": head_w, "gamma": gamma, "beta": beta}, hid


def ppm_forward(x_nchw, params, pool_sizes):
    N, Cin, H, W = x_nchw.shape
    hid = params["stage_w"][0].shape[1]
    Cout = params["head_w"].shape[1]
    HW = H * W
    nb = sum(p * p for p in pool_sizes)            # 1 + 4 + 16 + 36 = 57 bins
    KB = max(8, -(-nb // 8) * 8)                   # pad bin axis to sublane multiple

    # NCHW -> (N, H*W, C): channels on the lane dimension.
    x3 = jnp.transpose(x_nchw, (0, 2, 3, 1)).reshape(N, HW, Cin)
    p_all, r_all = _build_spatial_mats(H, W, pool_sizes, KB)

    row_bytes = (Cin + Cout + 2 * KB) * 4
    tm = _choose_tile(HW, row_bytes)

    # K1: all four adaptive average pools in one tiled pass over x.
    pooled = _pool_all(x3, p_all, tm)                                  # (N, KB, Cin)

    # Tiny glue: per-stage 1x1 conv on the pooled bins, then the head-conv
    # weight slice for that branch.  (Bilinear upsample commutes with the
    # channel-wise 1x1 head conv, so the full-resolution branch maps and the
    # channel concat never exist in HBM.)
    w_head = params["head_w"].astype(jnp.float32)
    w_x = w_head[:Cin]                                                 # concat slot 0: x
    b_all = jnp.zeros((N, KB, Cout), jnp.float32)
    off = 0
    for i, p in enumerate(pool_sizes):
        nbi = p * p
        w_i = params["stage_w"][i].astype(jnp.float32)                 # (Cin, hid)
        w_h = w_head[Cin + i * hid: Cin + (i + 1) * hid]               # (hid, Cout)
        z = jnp.einsum("nkc,ch->nkh", pooled[:, off:off + nbi, :], w_i)
        b_all = b_all.at[:, off:off + nbi, :].set(
            jnp.einsum("nkh,hd->nkd", z, w_h))
        off += nbi

    # K2: head 1x1 conv with in-kernel bilinear upsample + BN partial stats.
    y_pre, ssum, ssq = _head_conv(x3, r_all, b_all, w_x, tm)

    # Two-phase BatchNorm (training mode, biased variance) + ReLU.
    cnt = float(N * HW)
    mean = jnp.sum(ssum, axis=(0, 1)) / cnt                            # (Cout,)
    var = jnp.maximum(jnp.sum(ssq, axis=(0, 1)) / cnt - mean * mean, 0.0)
    scale = (params["gamma"] * jax.lax.rsqrt(var + EPS)).reshape(1, Cout)
    shift = (params["beta"] - mean * scale[0]).reshape(1, Cout)

    out = _bn_relu_apply(y_pre, scale, shift, tm, x_nchw.dtype)        # (N, HW, Cout)
    return jnp.transpose(out.reshape(N, H, W, Cout), (0, 3, 1, 2))     # -> NCHW


if __name__ == "__main__":
    key = jax.random.PRNGKey(0)
    kx, kp = jax.random.split(key)

    N, Cin, H, W = 2, 16, 16, 16
    out_channels = 32
    pool_sizes = [1, 2, 4, 6]

    x = jax.random.normal(kx, (N, Cin, H, W), jnp.float32)   # NCHW, like PyTorch
    params, hid = init_ppm_params(kp, Cin, out_channels, pool_sizes)

    fwd = jax.jit(functools.partial(ppm_forward, pool_sizes=pool_sizes))
    y = jax.block_until_ready(fwd(x, params))

    assert y.shape == (N, out_channels, H, W), y.shape
    assert bool(jnp.all(jnp.isfinite(y)))
    assert bool(jnp.all(y >= 0.0))       # ReLU output
    print("KERNEL_OK")
</pallas_src>

<mosaic_0001>
module attributes {stable_mosaic.version = 11 : i64} {
  func.func @_pool_kernel(%arg0: i32, %arg1: i32, %arg2: memref<1x128x16xf32, #tpu.memory_space<vmem>>, %arg3: memref<128x64xf32, #tpu.memory_space<vmem>>, %arg4: memref<1x64x16xf32, #tpu.memory_space<vmem>>) attributes {dimension_semantics = [#tpu.dimension_semantics<parallel>, #tpu.dimension_semantics<arbitrary>], iteration_bounds = array<i64: 2, 2>, scalar_prefetch = 0 : i64, scratch_operands = 0 : i64, tpu.core_type = #tpu.core_type<tc>, window_params = [{transform_indices = @transform_0, window_bounds = array<i64: 1, 128, 16>}, {transform_indices = @transform_1, window_bounds = array<i64: 128, 64>}, {transform_indices = @transform_2, window_bounds = array<i64: 1, 64, 16>}]} {
    %c0_i32 = arith.constant 0 : i32
    %0 = arith.cmpi eq, %arg1, %c0_i32 : i32
    %1 = arith.extui %0 : i1 to i32
    %c0_i32_0 = arith.constant 0 : i32
    %2 = arith.cmpi ne, %1, %c0_i32_0 : i32
    scf.if %2 {
      %cst_11 = arith.constant 0.000000e+00 : f32
      %13 = vector.broadcast %cst_11 : f32 to vector<1x64x16xf32>
      %c0_12 = arith.constant 0 : index
      %c0_13 = arith.constant 0 : index
      %c0_14 = arith.constant 0 : index
      %14 = vector.load %arg4[%c0_12, %c0_13, %c0_14] : memref<1x64x16xf32, #tpu.memory_space<vmem>>, vector<1x64x16xf32>
      tpu.vector_store %arg4[%c0_12, %c0_13, %c0_14], %13 {strides = array<i32>} : memref<1x64x16xf32, #tpu.memory_space<vmem>>, vector<1x64x16xf32>,
    } else {
    }
    %c0 = arith.constant 0 : index
    %c0_1 = arith.constant 0 : index
    %3 = vector.load %arg3[%c0, %c0_1] : memref<128x64xf32, #tpu.memory_space<vmem>>, vector<128x64xf32>
    %c0_2 = arith.constant 0 : index
    %c0_3 = arith.constant 0 : index
    %c0_4 = arith.constant 0 : index
    %4 = vector.load %arg2[%c0_2, %c0_3, %c0_4] : memref<1x128x16xf32, #tpu.memory_space<vmem>>, vector<1x128x16xf32>
    %5 = vector.shape_cast %4 : vector<1x128x16xf32> to vector<128x16xf32>
    %cst = arith.constant dense<0.000000e+00> : vector<64x16xf32>
    %6 = tpu.matmul %3, %5, %cst {dimension_numbers = #tpu.dot_dimension_numbers<[0], [0], [1], [1], [0, 1, 1, 1], [], []>} : vector<128x64xf32>, vector<128x16xf32>, vector<64x16xf32> -> vector<64x16xf32>
    %c0_5 = arith.constant 0 : index
    %c0_6 = arith.constant 0 : index
    %c0_7 = arith.constant 0 : index
    %7 = vector.load %arg4[%c0_5, %c0_6, %c0_7] : memref<1x64x16xf32, #tpu.memory_space<vmem>>, vector<1x64x16xf32>
    %8 = vector.shape_cast %7 : vector<1x64x16xf32> to vector<64x16xf32>
    %9 = arith.addf %8, %6 : vector<64x16xf32>
    %c0_8 = arith.constant 0 : index
    %c0_9 = arith.constant 0 : index
    %c0_10 = arith.constant 0 : index
    %10 = vector.load %arg4[%c0_8, %c0_9, %c0_10] : memref<1x64x16xf32, #tpu.memory_space<vmem>>, vector<1x64x16xf32>
    %11 = vector.shape_cast %10 : vector<1x64x16xf32> to vector<64x16xf32>
    %12 = vector.shape_cast %9 : vector<64x16xf32> to vector<1x64x16xf32>
    tpu.vector_store %arg4[%c0_8, %c0_9, %c0_10], %12 {strides = array<i32>} : memref<1x64x16xf32, #tpu.memory_space<vmem>>, vector<1x64x16xf32>,
    return
  }
  func.func @transform_0(%arg0: i32, %arg1: i32) -> (i32, i32, i32) {
    %c0_i32 = arith.constant 0 : i32
    %c0_i32_0 = arith.constant 0 : i32
    return %arg0, %arg1, %c0_i32 : i32, i32, i32
  }
  func.func @transform_1(%arg0: i32, %arg1: i32) -> (i32, i32) {
    %c0_i32 = arith.constant 0 : i32
    %c0_i32_0 = arith.constant 0 : i32
    return %arg1, %c0_i32 : i32, i32
  }
  func.func @transform_2(%arg0: i32, %arg1: i32) -> (i32, i32, i32) {
    %c0_i32 = arith.constant 0 : i32
    %c0_i32_0 = arith.constant 0 : i32
    %c0_i32_1 = arith.constant 0 : i32
    return %arg0, %c0_i32, %c0_i32_0 : i32, i32, i32
  }
}

module attributes {stable_mosaic.version = 11 : i64} {
  func.func @_head_kernel(%arg0: i32, %arg1: i32, %arg2: memref<1x128x16xf32, #tpu.memory_space<vmem>>, %arg3: memref<128x64xf32, #tpu.memory_space<vmem>>, %arg4: memref<1x64x32xf32, #tpu.memory_space<vmem>>, %arg5: memref<16x32xf32, #tpu.memory_space<vmem>>, %arg6: memref<1x128x32xf32, #tpu.memory_space<vmem>>, %arg7: memref<1x1x32xf32, #tpu.memory_space<vmem>>, %arg8: memref<1x1x32xf32, #tpu.memory_space<vmem>>) attributes {dimension_semantics = [#tpu.dimension_semantics<parallel>, #tpu.dimension_semantics<arbitrary>], iteration_bounds = array<i64: 2, 2>, scalar_prefetch = 0 : i64, scratch_operands = 0 : i64, tpu.core_type = #tpu.core_type<tc>, window_params = [{transform_indices = @transform_0, window_bounds = array<i64: 1, 128, 16>}, {transform_indices = @transform_1, window_bounds = array<i64: 128, 64>}, {transform_indices = @transform_2, window_bounds = array<i64: 1, 64, 32>}, {pipeline_mode = #tpu.pipeline_mode<synchronous>, transform_indices = @transform_3, window_bounds = array<i64: 16, 32>}, {transform_indices = @transform_4, window_bounds = array<i64: 1, 128, 32>}, {transform_indices = @transform_5, window_bounds = array<i64: 1, 1, 32>}, {transform_indices = @transform_6, window_bounds = array<i64: 1, 1, 32>}]} {
    %c0 = arith.constant 0 : index
    %c0_0 = arith.constant 0 : index
    %c0_1 = arith.constant 0 : index
    %0 = vector.load %arg2[%c0, %c0_0, %c0_1] : memref<1x128x16xf32, #tpu.memory_space<vmem>>, vector<1x128x16xf32>
    %1 = vector.shape_cast %0 : vector<1x128x16xf32> to vector<128x16xf32>
    %c0_2 = arith.constant 0 : index
    %c0_3 = arith.constant 0 : index
    %2 = vector.load %arg5[%c0_2, %c0_3] : memref<16x32xf32, #tpu.memory_space<vmem>>, vector<16x32xf32>
    %cst = arith.constant dense<0.000000e+00> : vector<128x32xf32>
    %3 = tpu.matmul %1, %2, %cst {dimension_numbers = #tpu.dot_dimension_numbers<[1], [0], [0], [1], [0, 0, 1, 1], [], []>} : vector<128x16xf32>, vector<16x32xf32>, vector<128x32xf32> -> vector<128x32xf32>
    %c0_4 = arith.constant 0 : index
    %c0_5 = arith.constant 0 : index
    %4 = vector.load %arg3[%c0_4, %c0_5] : memref<128x64xf32, #tpu.memory_space<vmem>>, vector<128x64xf32>
    %c0_6 = arith.constant 0 : index
    %c0_7 = arith.constant 0 : index
    %c0_8 = arith.constant 0 : index
    %5 = vector.load %arg4[%c0_6, %c0_7, %c0_8] : memref<1x64x32xf32, #tpu.memory_space<vmem>>, vector<1x64x32xf32>
    %6 = vector.shape_cast %5 : vector<1x64x32xf32> to vector<64x32xf32>
    %cst_9 = arith.constant dense<0.000000e+00> : vector<128x32xf32>
    %7 = tpu.matmul %4, %6, %cst_9 {dimension_numbers = #tpu.dot_dimension_numbers<[1], [0], [0], [1], [0, 0, 1, 1], [], []>} : vector<128x64xf32>, vector<64x32xf32>, vector<128x32xf32> -> vector<128x32xf32>
    %8 = arith.addf %3, %7 : vector<128x32xf32>
    %c0_10 = arith.constant 0 : index
    %c0_11 = arith.constant 0 : index
    %c0_12 = arith.constant 0 : index
    %9 = vector.load %arg6[%c0_10, %c0_11, %c0_12] : memref<1x128x32xf32, #tpu.memory_space<vmem>>, vector<1x128x32xf32>
    %10 = vector.shape_cast %9 : vector<1x128x32xf32> to vector<128x32xf32>
    %11 = vector.shape_cast %8 : vector<128x32xf32> to vector<1x128x32xf32>
    tpu.vector_store %arg6[%c0_10, %c0_11, %c0_12], %11 {strides = array<i32>} : memref<1x128x32xf32, #tpu.memory_space<vmem>>, vector<1x128x32xf32>,
    %c0_i32 = arith.constant 0 : i32
    %12 = arith.cmpi eq, %arg1, %c0_i32 : i32
    %13 = arith.extui %12 : i1 to i32
    %c0_i32_13 = arith.constant 0 : i32
    %14 = arith.cmpi ne, %13, %c0_i32_13 : i32
    scf.if %14 {
      %cst_28 = arith.constant 0.000000e+00 : f32
      %32 = vector.broadcast %cst_28 : f32 to vector<1x1x32xf32>
      %c0_29 = arith.constant 0 : index
      %c0_30 = arith.constant 0 : index
      %c0_31 = arith.constant 0 : index
      %33 = vector.load %arg7[%c0_29, %c0_30, %c0_31] : memref<1x1x32xf32, #tpu.memory_space<vmem>>, vector<1x1x32xf32>
      tpu.vector_store %arg7[%c0_29, %c0_30, %c0_31], %32 {strides = array<i32>} : memref<1x1x32xf32, #tpu.memory_space<vmem>>, vector<1x1x32xf32>,
      %cst_32 = arith.constant 0.000000e+00 : f32
      %34 = vector.broadcast %cst_32 : f32 to vector<1x1x32xf32>
      %c0_33 = arith.constant 0 : index
      %c0_34 = arith.constant 0 : index
      %c0_35 = arith.constant 0 : index
      %35 = vector.load %arg8[%c0_33, %c0_34, %c0_35] : memref<1x1x32xf32, #tpu.memory_space<vmem>>, vector<1x1x32xf32>
      tpu.vector_store %arg8[%c0_33, %c0_34, %c0_35], %34 {strides = array<i32>} : memref<1x1x32xf32, #tpu.memory_space<vmem>>, vector<1x1x32xf32>,
    } else {
    }
    %c0_14 = arith.constant 0 : index
    %c0_15 = arith.constant 0 : index
    %c0_16 = arith.constant 0 : index
    %15 = vector.load %arg7[%c0_14, %c0_15, %c0_16] : memref<1x1x32xf32, #tpu.memory_space<vmem>>, vector<1x1x32xf32>
    %16 = vector.shape_cast %15 : vector<1x1x32xf32> to vector<1x32xf32>
    %cst_17 = arith.constant dense<0.000000e+00> : vector<32xf32>
    %17 = vector.multi_reduction <add>, %8, %cst_17 [0] : vector<128x32xf32> to vector<32xf32>
    %18 = vector.shape_cast %17 : vector<32xf32> to vector<1x32xf32>
    %19 = arith.addf %16, %18 : vector<1x32xf32>
    %c0_18 = arith.constant 0 : index
    %c0_19 = arith.constant 0 : index
    %c0_20 = arith.constant 0 : index
    %20 = vector.load %arg7[%c0_18, %c0_19, %c0_20] : memref<1x1x32xf32, #tpu.memory_space<vmem>>, vector<1x1x32xf32>
    %21 = vector.shape_cast %20 : vector<1x1x32xf32> to vector<1x32xf32>
    %22 = vector.shape_cast %19 : vector<1x32xf32> to vector<1x1x32xf32>
    tpu.vector_store %arg7[%c0_18, %c0_19, %c0_20], %22 {strides = array<i32>} : memref<1x1x32xf32, #tpu.memory_space<vmem>>, vector<1x1x32xf32>,
    %c0_21 = arith.constant 0 : index
    %c0_22 = arith.constant 0 : index
    %c0_23 = arith.constant 0 : index
    %23 = vector.load %arg8[%c0_21, %c0_22, %c0_23] : memref<1x1x32xf32, #tpu.memory_space<vmem>>, vector<1x1x32xf32>
    %24 = vector.shape_cast %23 : vector<1x1x32xf32> to vector<1x32xf32>
    %25 = arith.mulf %8, %8 : vector<128x32xf32>
    %cst_24 = arith.constant dense<0.000000e+00> : vector<32xf32>
    %26 = vector.multi_reduction <add>, %25, %cst_24 [0] : vector<128x32xf32> to vector<32xf32>
    %27 = vector.shape_cast %26 : vector<32xf32> to vector<1x32xf32>
    %28 = arith.addf %24, %27 : vector<1x32xf32>
    %c0_25 = arith.constant 0 : index
    %c0_26 = arith.constant 0 : index
    %c0_27 = arith.constant 0 : index
    %29 = vector.load %arg8[%c0_25, %c0_26, %c0_27] : memref<1x1x32xf32, #tpu.memory_space<vmem>>, vector<1x1x32xf32>
    %30 = vector.shape_cast %29 : vector<1x1x32xf32> to vector<1x32xf32>
    %31 = vector.shape_cast %28 : vector<1x32xf32> to vector<1x1x32xf32>
    tpu.vector_store %arg8[%c0_25, %c0_26, %c0_27], %31 {strides = array<i32>} : memref<1x1x32xf32, #tpu.memory_space<vmem>>, vector<1x1x32xf32>,
    return
  }
  func.func @transform_0(%arg0: i32, %arg1: i32) -> (i32, i32, i32) {
    %c0_i32 = arith.constant 0 : i32
    %c0_i32_0 = arith.constant 0 : i32
    return %arg0, %arg1, %c0_i32 : i32, i32, i32
  }
  func.func @transform_1(%arg0: i32, %arg1: i32) -> (i32, i32) {
    %c0_i32 = arith.constant 0 : i32
    %c0_i32_0 = arith.constant 0 : i32
    return %arg1, %c0_i32 : i32, i32
  }
  func.func @transform_2(%arg0: i32, %arg1: i32) -> (i32, i32, i32) {
    %c0_i32 = arith.constant 0 : i32
    %c0_i32_0 = arith.constant 0 : i32
    %c0_i32_1 = arith.constant 0 : i32
    return %arg0, %c0_i32, %c0_i32_0 : i32, i32, i32
  }
  func.func @transform_3(%arg0: i32, %arg1: i32) -> (i32, i32) {
    %c0_i32 = arith.constant 0 : i32
    %c0_i32_0 = arith.constant 0 : i32
    %c0_i32_1 = arith.constant 0 : i32
    return %c0_i32, %c0_i32_0 : i32, i32
  }
  func.func @transform_4(%arg0: i32, %arg1: i32) -> (i32, i32, i32) {
    %c0_i32 = arith.constant 0 : i32
    %c0_i32_0 = arith.constant 0 : i32
    return %arg0, %arg1, %c0_i32 : i32, i32, i32
  }
  func.func @transform_5(%arg0: i32, %arg1: i32) -> (i32, i32, i32) {
    %c0_i32 = arith.constant 0 : i32
    %c0_i32_0 = arith.constant 0 : i32
    %c0_i32_1 = arith.constant 0 : i32
    return %arg0, %c0_i32, %c0_i32_0 : i32, i32, i32
  }
  func.func @transform_6(%arg0: i32, %arg1: i32) -> (i32, i32, i32) {
    %c0_i32 = arith.constant 0 : i32
    %c0_i32_0 = arith.constant 0 : i32
    %c0_i32_1 = arith.constant 0 : i32
    return %arg0, %c0_i32, %c0_i32_0 : i32, i32, i32
  }
}

module attributes {stable_mosaic.version = 11 : i64} {
  func.func @_bn_relu_kernel(%arg0: i32, %arg1: i32, %arg2: memref<1x128x32xf32, #tpu.memory_space<vmem>>, %arg3: memref<1x32xf32, #tpu.memory_space<vmem>>, %arg4: memref<1x32xf32, #tpu.memory_space<vmem>>, %arg5: memref<1x128x32xf32, #tpu.memory_space<vmem>>) attributes {dimension_semantics = [#tpu.dimension_semantics<parallel>, #tpu.dimension_semantics<parallel>], iteration_bounds = array<i64: 2, 2>, scalar_prefetch = 0 : i64, scratch_operands = 0 : i64, tpu.core_type = #tpu.core_type<tc>, window_params = [{transform_indices = @transform_0, window_bounds = array<i64: 1, 128, 32>}, {pipeline_mode = #tpu.pipeline_mode<synchronous>, transform_indices = @transform_1, window_bounds = array<i64: 1, 32>}, {pipeline_mode = #tpu.pipeline_mode<synchronous>, transform_indices = @transform_2, window_bounds = array<i64: 1, 32>}, {transform_indices = @transform_3, window_bounds = array<i64: 1, 128, 32>}]} {
    %c0 = arith.constant 0 : index
    %c0_0 = arith.constant 0 : index
    %c0_1 = arith.constant 0 : index
    %0 = vector.load %arg2[%c0, %c0_0, %c0_1] : memref<1x128x32xf32, #tpu.memory_space<vmem>>, vector<1x128x32xf32>
    %1 = vector.shape_cast %0 : vector<1x128x32xf32> to vector<128x32xf32>
    %c0_2 = arith.constant 0 : index
    %c0_3 = arith.constant 0 : index
    %2 = vector.load %arg3[%c0_2, %c0_3] : memref<1x32xf32, #tpu.memory_space<vmem>>, vector<1x32xf32>
    %3 = vector.broadcast %2 : vector<1x32xf32> to vector<128x32xf32>
    %4 = arith.mulf %1, %3 : vector<128x32xf32>
    %c0_4 = arith.constant 0 : index
    %c0_5 = arith.constant 0 : index
    %5 = vector.load %arg4[%c0_4, %c0_5] : memref<1x32xf32, #tpu.memory_space<vmem>>, vector<1x32xf32>
    %6 = vector.broadcast %5 : vector<1x32xf32> to vector<128x32xf32>
    %7 = arith.addf %4, %6 : vector<128x32xf32>
    %cst = arith.constant 0.000000e+00 : f32
    %8 = vector.broadcast %cst : f32 to vector<128x32xf32>
    %9 = arith.maximumf %7, %8 : vector<128x32xf32>
    %c0_6 = arith.constant 0 : index
    %c0_7 = arith.constant 0 : index
    %c0_8 = arith.constant 0 : index
    %10 = vector.load %arg5[%c0_6, %c0_7, %c0_8] : memref<1x128x32xf32, #tpu.memory_space<vmem>>, vector<1x128x32xf32>
    %11 = vector.shape_cast %10 : vector<1x128x32xf32> to vector<128x32xf32>
    %12 = vector.shape_cast %9 : vector<128x32xf32> to vector<1x128x32xf32>
    tpu.vector_store %arg5[%c0_6, %c0_7, %c0_8], %12 {strides = array<i32>} : memref<1x128x32xf32, #tpu.memory_space<vmem>>, vector<1x128x32xf32>,
    return
  }
  func.func @transform_0(%arg0: i32, %arg1: i32) -> (i32, i32, i32) {
    %c0_i32 = arith.constant 0 : i32
    %c0_i32_0 = arith.constant 0 : i32
    return %arg0, %arg1, %c0_i32 : i32, i32, i32
  }
  func.func @transform_1(%arg0: i32, %arg1: i32) -> (i32, i32) {
    %c0_i32 = arith.constant 0 : i32
    %c0_i32_0 = arith.constant 0 : i32
    %c0_i32_1 = arith.constant 0 : i32
    return %c0_i32, %c0_i32_0 : i32, i32
  }
  func.func @transform_2(%arg0: i32, %arg1: i32) -> (i32, i32) {
    %c0_i32 = arith.constant 0 : i32
    %c0_i32_0 = arith.constant 0 : i32
    %c0_i32_1 = arith.constant 0 : i32
    return %c0_i32, %c0_i32_0 : i32, i32
  }
  func.func @transform_3(%arg0: i32, %arg1: i32) -> (i32, i32, i32) {
    %c0_i32 = arith.constant 0 : i32
    %c0_i32_0 = arith.constant 0 : i32
    return %arg0, %arg1, %c0_i32 : i32, i32, i32
  }
}

</mosaic_0001>

<llo_original>
// kernel: ppm_forward.3
$region0: #{ppm_forward.3}
  #allocation0 [shape = 'u32[]', space=smem, size = 0x4, offset = 0x4, fixed_abs, tag = 'smem constant byte address 0x4 - core index']
  #allocation1 [shape = 'u32[144,128]{1,0:T(1,128)}', space=vmem, size = 0x12000, scoped, tag = 'internal scratch']
  %s0 = inlined_call_operand.vmem [shape: f32[2,256,16], index: 0, kind: input, shape index: {}]
  %s1 = inlined_call_operand.vmem [shape: f32[256,64], index: 1, kind: input, shape index: {}]
  %s2 = inlined_call_operand.vmem [shape: f32[2,64,16], index: 2, kind: output, shape index: {}]
  %s3 = sld [smem:[#allocation0]]
  $region45: #{ppm_forward.3} parent=0
    _
  %s5 = ssub.s32 1, %s3
  %s6 = scalar_select 0, %s5, %s3
  loop: start=0, step=1, limit=6
  $region2: #{ppm_forward.3} parent=0 // loop_pre_header
    _
  $region3: #{ppm_forward.3} parent=0 // loop_header
    %s8 = sphi 0, %s12
    %p9 = scmp.ge.s32.totalorder %s8, 6
    %s15 = sphi 0, %s27
    %s16 = sphi 0, %s23
    %s17 = sphi 0, %s15
    %s18 = sphi 0, %s16
    %s19 = sphi 0, %s17
    %s20 = sphi 0, %s18
    %s32 = sphi 0, %s34
    %s35 = sphi 0, %s32
    %s36 = sphi 0, %s35
    %s52 = sphi 0, %s36
    %s58 = sphi 0, %s60
    %s61 = sphi 0, %s58
    %s62 = sphi 0, %s61
    %s78 = sphi 0, %s62
    %s84 = sphi 0, %s86
    %s87 = sphi 0, %s84
    %s88 = sphi 0, %s87
    %s104 = sphi 0, %s88
  $region4: #{ppm_forward.3} parent=0 // loop_header_branch
    %11 = sbr.rel (%p9) target = $region8
  $region5: #{ppm_forward.3} parent=0 // loop_body
    %s13 = ssub.s32 %s8, 1
    %s14 = ssub.s32 %s8, 2
    %s21 = sadd.s32 1, %s16
    %p22 = scmp.ge.s32.totalorder %s21, 2
    %s23 = scalar_select %p22, 0, %s21
    %s24 = sadd.s32 1, %s15
    %s25 = scalar_select %p22, %s24, %s15
    %p26 = scmp.ge.s32.totalorder %s25, 2
    %s27 = scalar_select %p26, 0, %s25
    %s28 = ssub.s32 %s15, %s27
    %s29 = ssub.s32 %s16, %s23
    %s30 = sor.u32 %s28, %s29
    %p31 = scmp.eq.s32.totalorder %s30, 0
    %s33 = sadd.s32 %s32, 1
    %s34 = scalar_select %p31, %s32, %s33
    %p37 = pneg %p31
    %p38 = scmp.eq.s32.totalorder %s8, 3
    %p39 = por %p37, %p38
    %p40 = scmp.ne.s32.totalorder %s32, %s35
    %p41 = scmp.eq.s32.totalorder %s8, 0
    %p42 = por %p40, %p41
    %p43 = scmp.ne.s32.totalorder %s32, %s35
    %p44 = scmp.eq.s32.totalorder %s13, 3
    %p45 = por %p43, %p44
    %p46 = scmp.ne.s32.totalorder %s35, %s36
    %p47 = scmp.eq.s32.totalorder %s13, 0
    %p48 = por %p46, %p47
    %p49 = scmp.ne.s32.totalorder %s35, %s36
    %p50 = scmp.eq.s32.totalorder %s14, 3
    %p51 = por %p49, %p50
    %p53 = scmp.ne.s32.totalorder %s36, %s52
    %p54 = scmp.eq.s32.totalorder %s14, 0
    %p55 = por %p53, %p54
    %s56 = ssub.s32 %s16, %s23
    %p57 = scmp.eq.s32.totalorder %s56, 0
    %s59 = sadd.s32 %s58, 1
    %s60 = scalar_select %p57, %s58, %s59
    %p63 = pneg %p57
    %p64 = scmp.eq.s32.totalorder %s8, 3
    %p65 = por %p63, %p64
    %p66 = scmp.ne.s32.totalorder %s58, %s61
    %p67 = scmp.eq.s32.totalorder %s8, 0
    %p68 = por %p66, %p67
    %p69 = scmp.ne.s32.totalorder %s58, %s61
    %p70 = scmp.eq.s32.totalorder %s13, 3
    %p71 = por %p69, %p70
    %p72 = scmp.ne.s32.totalorder %s61, %s62
    %p73 = scmp.eq.s32.totalorder %s13, 0
    %p74 = por %p72, %p73
    %p75 = scmp.ne.s32.totalorder %s61, %s62
    %p76 = scmp.eq.s32.totalorder %s14, 3
    %p77 = por %p75, %p76
    %p79 = scmp.ne.s32.totalorder %s62, %s78
    %p80 = scmp.eq.s32.totalorder %s14, 0
    %p81 = por %p79, %p80
    %s82 = ssub.s32 %s15, %s27
    %p83 = scmp.eq.s32.totalorder %s82, 0
    %s85 = sadd.s32 %s84, 1
    %s86 = scalar_select %p83, %s84, %s85
    %p89 = pneg %p83
    %p90 = scmp.eq.s32.totalorder %s8, 3
    %p91 = por %p89, %p90
    %p92 = scmp.ne.s32.totalorder %s84, %s87
    %p93 = scmp.eq.s32.totalorder %s8, 0
    %p94 = por %p92, %p93
    %p95 = scmp.ne.s32.totalorder %s84, %s87
    %p96 = scmp.eq.s32.totalorder %s13, 3
    %p97 = por %p95, %p96
    %p98 = scmp.ne.s32.totalorder %s87, %s88
    %p99 = scmp.eq.s32.totalorder %s13, 0
    %p100 = por %p98, %p99
    %p101 = scmp.ne.s32.totalorder %s87, %s88
    %p102 = scmp.eq.s32.totalorder %s14, 3
    %p103 = por %p101, %p102
    %p105 = scmp.ne.s32.totalorder %s88, %s104
    %p106 = scmp.eq.s32.totalorder %s14, 0
    %p107 = por %p105, %p106
    %p108 = scmp.le.s32.totalorder 1, %s8
    %p109 = scmp.lt.s32.totalorder %s8, 5
    %p110 = pnand %p108, %p109
    %p111 = pneg %p110
    // Predicated region
    $region9: #{ppm_forward.3} parent=5 // pred_check
      _
    $region10: #{ppm_forward.3} parent=5 // pred_check_branch
      %113 = sbr.rel (%p110) target = $region12
    $region11: #{ppm_forward.3} parent=5 // pred_region
      %s114 = ssub.s32 %s8, 1
    $region12: #{ppm_forward.3} parent=5 // pred_fallthru
      _
    %p115 = scmp.lt.s32.totalorder %s8, 4
    // Predicated region
    $region13: #{ppm_forward.3} parent=5 // pred_check
      %p116 = pneg %p115
    $region14: #{ppm_forward.3} parent=5 // pred_check_branch
      %118 = sbr.rel (%p116) target = $region16
    $region15: #{ppm_forward.3} parent=5 // pred_region
      // Predicated region
      $region17: #{ppm_forward.3} parent=15 // pred_check
        %p119 = pneg %p42
      $region18: #{ppm_forward.3} parent=15 // pred_check_branch
        %121 = sbr.rel (%p119) target = $region20
      $region19: #{ppm_forward.3} parent=15 // pred_region
        %s122 = smul.u32 16, %s16
        %p123 = scmp.lt.s32.totalorder %s15, 1
        %s124 = scalar_select %p123, %s15, 1
        %p125 = scmp.lt.s32.totalorder %s122, 31
        %s126 = scalar_select %p125, %s122, 31
        %s127 = smul.addr %s124, 32
        %s128 = sadd.s32 %s126, %s127
        %s129 = smul.addr %s128, 8
        %s130 = scalar_lea.vmem %s0, %s129
        %s131 = smul.u32 16, %s16
      $region20: #{ppm_forward.3} parent=15 // pred_fallthru
        _
      // Predicated region
      $region21: #{ppm_forward.3} parent=15 // pred_check
        %p132 = pneg %p68
      $region22: #{ppm_forward.3} parent=15 // pred_check_branch
        %134 = sbr.rel (%p132) target = $region24
      $region23: #{ppm_forward.3} parent=15 // pred_region
        %s135 = smul.u32 16, %s16
        %p136 = scmp.lt.s32.totalorder %s135, 31
        %s137 = scalar_select %p136, %s135, 31
        %s138 = smul.addr %s137, 8
        %s139 = scalar_lea.vmem %s1, %s138
        %s140 = smul.u32 16, %s16
      $region24: #{ppm_forward.3} parent=15 // pred_fallthru
        _
    $region16: #{ppm_forward.3} parent=5 // pred_fallthru
      _
    %p141 = scmp.le.s32.totalorder 1, %s8
    %p142 = scmp.lt.s32.totalorder %s8, 5
    %p143 = pnand %p141, %p142
    %p144 = pneg %p143
    // Predicated region
    $region25: #{ppm_forward.3} parent=5 // pred_check
      _
    $region26: #{ppm_forward.3} parent=5 // pred_check_branch
      %146 = sbr.rel (%p143) target = $region28
    $region27: #{ppm_forward.3} parent=5 // pred_region
      %s147 = ssub.s32 %s8, 1
      %s148 = smul.u32 16, %s18
      %p149 = scmp.lt.s32.totalorder %s17, 1
      %s150 = scalar_select %p149, %s17, 1
      %p151 = scmp.lt.s32.totalorder %s148, 31
      %s152 = scalar_select %p151, %s148, 31
      %s153 = smul.addr %s150, 32
      %s154 = sadd.s32 %s152, %s153
      %s155 = smul.addr %s154, 8
      %s156 = scalar_lea.vmem %s0, %s155
      %p157 = pneg %p48
      %p158 = pneg %p45
      %s159 = smul.u32 16, %s18
      %p160 = scmp.lt.s32.totalorder %s159, 31
      %s161 = scalar_select %p160, %s159, 31
      %s162 = smul.addr %s161, 8
      %s163 = scalar_lea.vmem %s1, %s162
      %p164 = pneg %p74
      %p165 = pneg %p71
      %p166 = pneg %p100
      %p167 = pneg %p97
      %p168 = scmp.lt.s32.totalorder %s17, 1
      %s169 = scalar_select %p168, %s17, 1
      %s170 = smul.addr %s169, 8
      %s171 = smul.addr %s170, 8
      %s172 = scalar_lea.vmem %s2, %s171
      %s173 = smul.u32 16, %s18
      %p174 = scmp.lt.s32.totalorder %s17, 1
      %s175 = scalar_select %p174, %s17, 1
      %p176 = scmp.lt.s32.totalorder %s173, 31
      %s177 = scalar_select %p176, %s173, 31
      %s178 = smul.addr %s175, 32
      %s179 = sadd.s32 %s177, %s178
      %s180 = smul.addr %s179, 8
      %s181 = scalar_lea.vmem %s0, %s180
      %s182 = smul.u32 16, %s18
      %s183 = smul.u32 16, %s18
      %p184 = scmp.lt.s32.totalorder %s183, 31
      %s185 = scalar_select %p184, %s183, 31
      %s186 = smul.addr %s185, 8
      %s187 = scalar_lea.vmem %s1, %s186
      %s188 = smul.u32 16, %s18
      %p189 = scmp.lt.s32.totalorder %s17, 1
      %s190 = scalar_select %p189, %s17, 1
      %s191 = smul.addr %s190, 8
      %s192 = smul.addr %s191, 8
      %s193 = scalar_lea.vmem %s2, %s192
      %p194 = scmp.eq.s32.totalorder %s18, 0
      // Predicated region
      $region29: #{ppm_forward.3} parent=27 // pred_check
        %p195 = pneg %p194
      $region30: #{ppm_forward.3} parent=27 // pred_check_branch
        %197 = sbr.rel (%p195) target = $region32
      $region31: #{ppm_forward.3} parent=27 // pred_region
        %vm198 = vcmask 130048
        %199 = vst.msk [vmem:[%s193] sm:$0xff] %vm198, 0.0
        %200 = vst.msk [vmem:[%s193 + $0x8] sm:$0xff] %vm198, 0.0
        %201 = vst.msk [vmem:[%s193 + $0x10] sm:$0xff] %vm198, 0.0
        %202 = vst.msk [vmem:[%s193 + $0x18] sm:$0xff] %vm198, 0.0
        %203 = vst.msk [vmem:[%s193 + $0x20] sm:$0xff] %vm198, 0.0
        %204 = vst.msk [vmem:[%s193 + $0x28] sm:$0xff] %vm198, 0.0
        %205 = vst.msk [vmem:[%s193 + $0x30] sm:$0xff] %vm198, 0.0
        %206 = vst.msk [vmem:[%s193 + $0x38] sm:$0xff] %vm198, 0.0
      $region32: #{ppm_forward.3} parent=27 // pred_fallthru
        _
      %v207 = vld [vmem:[%s187] sm:$0xff]
      %v208 = vld [vmem:[%s187 + $0x8] sm:$0xff]
      %v209 = vld [vmem:[%s187 + $0x10] sm:$0xff]
      %v210 = vld [vmem:[%s187 + $0x18] sm:$0xff]
      %v211 = vld [vmem:[%s187 + $0x20] sm:$0xff]
      %v212 = vld [vmem:[%s187 + $0x28] sm:$0xff]
      %v213 = vld [vmem:[%s187 + $0x30] sm:$0xff]
      %v214 = vld [vmem:[%s187 + $0x38] sm:$0xff]
      %v215 = vld [vmem:[%s187 + $0x40] sm:$0xff]
      %v216 = vld [vmem:[%s187 + $0x48] sm:$0xff]
      %v217 = vld [vmem:[%s187 + $0x50] sm:$0xff]
      %v218 = vld [vmem:[%s187 + $0x58] sm:$0xff]
      %v219 = vld [vmem:[%s187 + $0x60] sm:$0xff]
      %v220 = vld [vmem:[%s187 + $0x68] sm:$0xff]
      %v221 = vld [vmem:[%s187 + $0x70] sm:$0xff]
      %v222 = vld [vmem:[%s187 + $0x78] sm:$0xff]
      %v223 = vld [vmem:[%s181] sm:$0xff]
      %v224 = vld [vmem:[%s181 + $0x8] sm:$0xff]
      %v225 = vld [vmem:[%s181 + $0x10] sm:$0xff]
      %v226 = vld [vmem:[%s181 + $0x18] sm:$0xff]
      %v227 = vld [vmem:[%s181 + $0x20] sm:$0xff]
      %v228 = vld [vmem:[%s181 + $0x28] sm:$0xff]
      %v229 = vld [vmem:[%s181 + $0x30] sm:$0xff]
      %v230 = vld [vmem:[%s181 + $0x38] sm:$0xff]
      %v231 = vld [vmem:[%s181 + $0x40] sm:$0xff]
      %v232 = vld [vmem:[%s181 + $0x48] sm:$0xff]
      %v233 = vld [vmem:[%s181 + $0x50] sm:$0xff]
      %v234 = vld [vmem:[%s181 + $0x58] sm:$0xff]
      %v235 = vld [vmem:[%s181 + $0x60] sm:$0xff]
      %v236 = vld [vmem:[%s181 + $0x68] sm:$0xff]
      %v237 = vld [vmem:[%s181 + $0x70] sm:$0xff]
      %v238 = vld [vmem:[%s181 + $0x78] sm:$0xff]
      %239 = vxpose.xlu0.b32.start [1/16] %v207, 128
      %240 = vxpose.xlu0.b32.cont [2/16] %v208, 128
      %241 = vxpose.xlu0.b32.cont [3/16] %v209, 128
      %242 = vxpose.xlu0.b32.cont [4/16] %v210, 128
      %243 = vxpose.xlu0.b32.cont [5/16] %v211, 128
      %244 = vxpose.xlu0.b32.cont [6/16] %v212, 128
      %245 = vxpose.xlu0.b32.cont [7/16] %v213, 128
      %246 = vxpose.xlu0.b32.cont [8/16] %v214, 128
      %247 = vxpose.xlu0.b32.cont [9/16] %v215, 128
      %248 = vxpose.xlu0.b32.cont [10/16] %v216, 128
      %249 = vxpose.xlu0.b32.cont [11/16] %v217, 128
      %250 = vxpose.xlu0.b32.cont [12/16] %v218, 128
      %251 = vxpose.xlu0.b32.cont [13/16] %v219, 128
      %252 = vxpose.xlu0.b32.cont [14/16] %v220, 128
      %253 = vxpose.xlu0.b32.cont [15/16] %v221, 128
      %254 = vxpose.xlu0.b32.end [16/16] %v222, 128
      %v255 = vpop.trf.xlu0
      %v256 = vpop.trf.xlu0
      %v257 = vpop.trf.xlu0
      %v258 = vpop.trf.xlu0
      %v259 = vpop.trf.xlu0
      %v260 = vpop.trf.xlu0
      %v261 = vpop.trf.xlu0
      %v262 = vpop.trf.xlu0
      %v263 = vpop.trf.xlu0
      %v264 = vpop.trf.xlu0
      %v265 = vpop.trf.xlu0
      %v266 = vpop.trf.xlu0
      %v267 = vpop.trf.xlu0
      %v268 = vpop.trf.xlu0
      %v269 = vpop.trf.xlu0
      %v270 = vpop.trf.xlu0
      %271 = vmatprep.subr.mxu0 0.0
      %272 = vmatpush1.msra.mxu0 %v238
      %273 = vmatprep.subr.mxu0 0.0
      %274 = vmatpush1.msra.mxu0 %v237
      %275 = vmatprep.subr.mxu0 0.0
      %276 = vmatpush1.msra.mxu0 %v236
      %277 = vmatprep.subr.mxu0 0.0
      %278 = vmatpush1.msra.mxu0 %v235
      %279 = vmatprep.subr.mxu0 0.0
      %280 = vmatpush1.msra.mxu0 %v234
      %281 = vmatprep.subr.mxu0 0.0
      %282 = vmatpush1.msra.mxu0 %v233
      %283 = vmatprep.subr.mxu0 0.0
      %284 = vmatpush1.msra.mxu0 %v232
      %285 = vmatprep.subr.mxu0 0.0
      %286 = vmatpush1.msra.mxu0 %v231
      %287 = vmatprep.subr.mxu0 0.0
      %288 = vmatpush1.msra.mxu0 %v230
      %289 = vmatprep.subr.mxu0 0.0
      %290 = vmatpush1.msra.mxu0 %v229
      %291 = vmatprep.subr.mxu0 0.0
      %292 = vmatpush1.msra.mxu0 %v228
      %293 = vmatprep.subr.mxu0 0.0
      %294 = vmatpush1.msra.mxu0 %v227
      %295 = vmatprep.subr.mxu0 0.0
      %296 = vmatpush1.msra.mxu0 %v226
      %297 = vmatprep.subr.mxu0 0.0
      %298 = vmatpush1.msra.mxu0 %v225
      %299 = vmatprep.subr.mxu0 0.0
      %300 = vmatpush1.msra.mxu0 %v224
      %301 = vmatprep.subr.mxu0 0.0
      %302 = vmatpush1.msra.mxu0 %v223
      %303 = vmatprep.subr.mxu0 0.0
      %304 = vmatpush2.msra.mxu0 0.0
      %305 = vmatprep.subr.mxu0 0.0
      %306 = vmatpush2.msra.mxu0 0.0
      %307 = vmatprep.subr.mxu0 0.0
      %308 = vmatpush2.msra.mxu0 0.0
      %309 = vmatprep.subr.mxu0 0.0
      %310 = vmatpush2.msra.mxu0 0.0
      %311 = vmatprep.subr.mxu0 0.0
      %312 = vmatpush2.msra.mxu0 0.0
      %313 = vmatprep.subr.mxu0 0.0
      %314 = vmatpush2.msra.mxu0 0.0
      %315 = vmatprep.subr.mxu0 0.0
      %316 = vmatpush2.msra.mxu0 0.0
      %317 = vmatprep.subr.mxu0 0.0
      %318 = vmatpush2.msra.mxu0 0.0
      %319 = vmatprep.subr.mxu0 0.0
      %320 = vmatpush2.msra.mxu0 0.0
      %321 = vmatprep.subr.mxu0 0.0
      %322 = vmatpush2.msra.mxu0 0.0
      %323 = vmatprep.subr.mxu0 0.0
      %324 = vmatpush2.msra.mxu0 0.0
      %325 = vmatprep.subr.mxu0 0.0
      %326 = vmatpush2.msra.mxu0 0.0
      %327 = vmatprep.subr.mxu0 0.0
      %328 = vmatpush2.msra.mxu0 0.0
      %329 = vmatprep.subr.mxu0 0.0
      %330 = vmatpush2.msra.mxu0 0.0
      %331 = vmatprep.subr.mxu0 0.0
      %332 = vmatpush2.msra.mxu0 0.0
      %333 = vmatprep.subr.mxu0 0.0
      %334 = vmatpush2.msra.mxu0 0.0
      %335 = vmatprep.mubr.f32.mxu0 0.0
      %336 = vmatmul.mubr.f32.gmra.mxu0 %v255
      %v337 = vpop.f32.mrf.mxu0
      %v338 = vadd.f32 0.0, %v337
      %v339 = vpop.f32.mrf.mxu0
      %340 = vmatprep.mubr.f32.mxu0 0.0
      %341 = vmatmul.mubr.f32.gmra.mxu0 %v256
      %v342 = vpop.f32.mrf.mxu0
      %v343 = vadd.f32 0.0, %v342
      %v344 = vpop.f32.mrf.mxu0
      %345 = vmatprep.mubr.f32.mxu0 0.0
      %346 = vmatmul.mubr.f32.gmra.mxu0 %v257
      %v347 = vpop.f32.mrf.mxu0
      %v348 = vadd.f32 0.0, %v347
      %v349 = vpop.f32.mrf.mxu0
      %350 = vmatprep.mubr.f32.mxu0 0.0
      %351 = vmatmul.mubr.f32.gmra.mxu0 %v258
      %v352 = vpop.f32.mrf.mxu0
      %v353 = vadd.f32 0.0, %v352
      %v354 = vpop.f32.mrf.mxu0
      %355 = vmatprep.mubr.f32.mxu0 0.0
      %356 = vmatmul.mubr.f32.gmra.mxu0 %v259
      %v357 = vpop.f32.mrf.mxu0
      %v358 = vadd.f32 0.0, %v357
      %v359 = vpop.f32.mrf.mxu0
      %360 = vmatprep.mubr.f32.mxu0 0.0
      %361 = vmatmul.mubr.f32.gmra.mxu0 %v260
      %v362 = vpop.f32.mrf.mxu0
      %v363 = vadd.f32 0.0, %v362
      %v364 = vpop.f32.mrf.mxu0
      %365 = vmatprep.mubr.f32.mxu0 0.0
      %366 = vmatmul.mubr.f32.gmra.mxu0 %v261
      %v367 = vpop.f32.mrf.mxu0
      %v368 = vadd.f32 0.0, %v367
      %v369 = vpop.f32.mrf.mxu0
      %370 = vmatprep.mubr.f32.mxu0 0.0
      %371 = vmatmul.mubr.f32.gmra.mxu0 %v262
      %v372 = vpop.f32.mrf.mxu0
      %v373 = vadd.f32 0.0, %v372
      %v374 = vpop.f32.mrf.mxu0
      %375 = vdwg.mxu0
      %v376 = vld [vmem:[%s193] sm:$0xff]
      %v377 = vld [vmem:[%s193 + $0x8] sm:$0xff]
      %v378 = vld [vmem:[%s193 + $0x10] sm:$0xff]
      %v379 = vld [vmem:[%s193 + $0x18] sm:$0xff]
      %v380 = vld [vmem:[%s193 + $0x20] sm:$0xff]
      %v381 = vld [vmem:[%s193 + $0x28] sm:$0xff]
      %v382 = vld [vmem:[%s193 + $0x30] sm:$0xff]
      %v383 = vld [vmem:[%s193 + $0x38] sm:$0xff]
      %v384 = vadd.f32 %v376, %v338
      %v385 = vadd.f32 %v377, %v343
      %v386 = vadd.f32 %v378, %v348
      %v387 = vadd.f32 %v379, %v353
      %v388 = vadd.f32 %v380, %v358
      %v389 = vadd.f32 %v381, %v363
      %v390 = vadd.f32 %v382, %v368
      %v391 = vadd.f32 %v383, %v373
      %vm392 = vcmask 130048
      %393 = vst.msk [vmem:[%s193] sm:$0xff] %vm392, %v384
      %394 = vst.msk [vmem:[%s193 + $0x8] sm:$0xff] %vm392, %v385
      %395 = vst.msk [vmem:[%s193 + $0x10] sm:$0xff] %vm392, %v386
      %396 = vst.msk [vmem:[%s193 + $0x18] sm:$0xff] %vm392, %v387
      %397 = vst.msk [vmem:[%s193 + $0x20] sm:$0xff] %vm392, %v388
      %398 = vst.msk [vmem:[%s193 + $0x28] sm:$0xff] %vm392, %v389
      %399 = vst.msk [vmem:[%s193 + $0x30] sm:$0xff] %vm392, %v390
      %400 = vst.msk [vmem:[%s193 + $0x38] sm:$0xff] %vm392, %v391
      %p401 = scmp.lt.s32.totalorder %s17, 1
      %s402 = scalar_select %p401, %s17, 1
      %s403 = smul.addr %s402, 8
      %s404 = smul.addr %s403, 8
      %s405 = scalar_lea.vmem %s2, %s404
      // Predicated region
      $region33: #{ppm_forward.3} parent=27 // pred_check
        %p406 = pneg %p97
      $region34: #{ppm_forward.3} parent=27 // pred_check_branch
        %408 = sbr.rel (%p406) target = $region36
      $region35: #{ppm_forward.3} parent=27 // pred_region
        _
      $region36: #{ppm_forward.3} parent=27 // pred_fallthru
        _
    $region28: #{ppm_forward.3} parent=5 // pred_fallthru
      _
    %p409 = scmp.le.s32.totalorder 2, %s8
    // Predicated region
    $region37: #{ppm_forward.3} parent=5 // pred_check
      %p410 = pneg %p409
    $region38: #{ppm_forward.3} parent=5 // pred_check_branch
      %412 = sbr.rel (%p410) target = $region40
    $region39: #{ppm_forward.3} parent=5 // pred_region
      %s413 = ssub.s32 %s8, 2
      // Predicated region
      $region41: #{ppm_forward.3} parent=39 // pred_check
        %p414 = pneg %p103
      $region42: #{ppm_forward.3} parent=39 // pred_check_branch
        %416 = sbr.rel (%p414) target = $region44
      $region43: #{ppm_forward.3} parent=39 // pred_region
        %p417 = scmp.lt.s32.totalorder %s19, 1
        %s418 = scalar_select %p417, %s19, 1
        %s419 = smul.addr %s418, 8
        %s420 = smul.addr %s419, 8
        %s421 = scalar_lea.vmem %s2, %s420
      $region44: #{ppm_forward.3} parent=39 // pred_fallthru
        _
    $region40: #{ppm_forward.3} parent=5 // pred_fallthru
      _
  $region6: #{ppm_forward.3} parent=0 // loop_footer
    %s12 = sadd.s32 1, %s8
  $region7: #{ppm_forward.3} parent=0 // loop_footer_branch
    %7 = sbr.rel target = $region3
  $region8: #{ppm_forward.3} parent=0 // loop_exit
    _

// kernel: ppm_forward.4
$region0: #{ppm_forward.4}
  #allocation0 [shape = 'u32[]', space=smem, size = 0x4, offset = 0x4, fixed_abs, tag = 'smem constant byte address 0x4 - core index']
  #allocation1 [shape = 'u32[144,128]{1,0:T(1,128)}', space=vmem, size = 0x12000, scoped, tag = 'internal scratch']
  %s0 = inlined_call_operand.vmem [shape: f32[2,256,16], index: 0, kind: input, shape index: {}]
  %s1 = inlined_call_operand.vmem [shape: f32[256,64], index: 1, kind: input, shape index: {}]
  %s2 = inlined_call_operand.vmem [shape: f32[2,64,32], index: 2, kind: input, shape index: {}]
  %s3 = inlined_call_operand.vmem [shape: f32[16,32], index: 3, kind: input, shape index: {}]
  %s4 = inlined_call_operand.vmem [shape: f32[2,256,32], index: 4, kind: output, shape index: {0}]
  %s5 = inlined_call_operand.vmem [shape: f32[2,1,32], index: 5, kind: output, shape index: {1}]
  %s6 = inlined_call_operand.vmem [shape: f32[2,1,32], index: 6, kind: output, shape index: {2}]
  %7 = xla_tuple %s4, %s5, %s6
  %s8 = sld [smem:[#allocation0]]
  $region69: #{ppm_forward.4} parent=0
    _
  %s10 = ssub.s32 1, %s8
  %s11 = scalar_select 0, %s10, %s8
  loop: start=0, step=1, limit=6
  $region2: #{ppm_forward.4} parent=0 // loop_pre_header
    _
  $region3: #{ppm_forward.4} parent=0 // loop_header
    %s13 = sphi 0, %s17
    %p14 = scmp.ge.s32.totalorder %s13, 6
    %s20 = sphi 0, %s32
    %s21 = sphi 0, %s28
    %s22 = sphi 0, %s20
    %s23 = sphi 0, %s21
    %s24 = sphi 0, %s22
    %s25 = sphi 0, %s23
    %s37 = sphi 0, %s39
    %s40 = sphi 0, %s37
    %s41 = sphi 0, %s40
    %s57 = sphi 0, %s41
    %s63 = sphi 0, %s65
    %s66 = sphi 0, %s63
    %s67 = sphi 0, %s66
    %s83 = sphi 0, %s67
    %s89 = sphi 0, %s91
    %s92 = sphi 0, %s89
    %s93 = sphi 0, %s92
    %s109 = sphi 0, %s93
    %s113 = sphi 0, %s113
    %s115 = sphi 0, %s113
    %s116 = sphi 0, %s115
    %s130 = sphi 0, %s116
    %s138 = sphi 0, %s140
    %s141 = sphi 0, %s138
    %s142 = sphi 0, %s141
    %s158 = sphi 0, %s142
    %s164 = sphi 0, %s166
    %s167 = sphi 0, %s164
    %s168 = sphi 0, %s167
    %s184 = sphi 0, %s168
    %s190 = sphi 0, %s192
    %s193 = sphi 0, %s190
    %s194 = sphi 0, %s193
    %s210 = sphi 0, %s194
  $region4: #{ppm_forward.4} parent=0 // loop_header_branch
    %16 = sbr.rel (%p14) target = $region8
  $region5: #{ppm_forward.4} parent=0 // loop_body
    %s18 = ssub.s32 %s13, 1
    %s19 = ssub.s32 %s13, 2
    %s26 = sadd.s32 1, %s21
    %p27 = scmp.ge.s32.totalorder %s26, 2
    %s28 = scalar_select %p27, 0, %s26
    %s29 = sadd.s32 1, %s20
    %s30 = scalar_select %p27, %s29, %s20
    %p31 = scmp.ge.s32.totalorder %s30, 2
    %s32 = scalar_select %p31, 0, %s30
    %s33 = ssub.s32 %s20, %s32
    %s34 = ssub.s32 %s21, %s28
    %s35 = sor.u32 %s33, %s34
    %p36 = scmp.eq.s32.totalorder %s35, 0
    %s38 = sadd.s32 %s37, 1
    %s39 = scalar_select %p36, %s37, %s38
    %p42 = pneg %p36
    %p43 = scmp.eq.s32.totalorder %s13, 3
    %p44 = por %p42, %p43
    %p45 = scmp.ne.s32.totalorder %s37, %s40
    %p46 = scmp.eq.s32.totalorder %s13, 0
    %p47 = por %p45, %p46
    %p48 = scmp.ne.s32.totalorder %s37, %s40
    %p49 = scmp.eq.s32.totalorder %s18, 3
    %p50 = por %p48, %p49
    %p51 = scmp.ne.s32.totalorder %s40, %s41
    %p52 = scmp.eq.s32.totalorder %s18, 0
    %p53 = por %p51, %p52
    %p54 = scmp.ne.s32.totalorder %s40, %s41
    %p55 = scmp.eq.s32.totalorder %s19, 3
    %p56 = por %p54, %p55
    %p58 = scmp.ne.s32.totalorder %s41, %s57
    %p59 = scmp.eq.s32.totalorder %s19, 0
    %p60 = por %p58, %p59
    %s61 = ssub.s32 %s21, %s28
    %p62 = scmp.eq.s32.totalorder %s61, 0
    %s64 = sadd.s32 %s63, 1
    %s65 = scalar_select %p62, %s63, %s64
    %p68 = pneg %p62
    %p69 = scmp.eq.s32.totalorder %s13, 3
    %p70 = por %p68, %p69
    %p71 = scmp.ne.s32.totalorder %s63, %s66
    %p72 = scmp.eq.s32.totalorder %s13, 0
    %p73 = por %p71, %p72
    %p74 = scmp.ne.s32.totalorder %s63, %s66
    %p75 = scmp.eq.s32.totalorder %s18, 3
    %p76 = por %p74, %p75
    %p77 = scmp.ne.s32.totalorder %s66, %s67
    %p78 = scmp.eq.s32.totalorder %s18, 0
    %p79 = por %p77, %p78
    %p80 = scmp.ne.s32.totalorder %s66, %s67
    %p81 = scmp.eq.s32.totalorder %s19, 3
    %p82 = por %p80, %p81
    %p84 = scmp.ne.s32.totalorder %s67, %s83
    %p85 = scmp.eq.s32.totalorder %s19, 0
    %p86 = por %p84, %p85
    %s87 = ssub.s32 %s20, %s32
    %p88 = scmp.eq.s32.totalorder %s87, 0
    %s90 = sadd.s32 %s89, 1
    %s91 = scalar_select %p88, %s89, %s90
    %p94 = pneg %p88
    %p95 = scmp.eq.s32.totalorder %s13, 3
    %p96 = por %p94, %p95
    %p97 = scmp.ne.s32.totalorder %s89, %s92
    %p98 = scmp.eq.s32.totalorder %s13, 0
    %p99 = por %p97, %p98
    %p100 = scmp.ne.s32.totalorder %s89, %s92
    %p101 = scmp.eq.s32.totalorder %s18, 3
    %p102 = por %p100, %p101
    %p103 = scmp.ne.s32.totalorder %s92, %s93
    %p104 = scmp.eq.s32.totalorder %s18, 0
    %p105 = por %p103, %p104
    %p106 = scmp.ne.s32.totalorder %s92, %s93
    %p107 = scmp.eq.s32.totalorder %s19, 3
    %p108 = por %p106, %p107
    %p110 = scmp.ne.s32.totalorder %s93, %s109
    %p111 = scmp.eq.s32.totalorder %s19, 0
    %p112 = por %p110, %p111
    %s114 = sadd.s32 %s113, 1
    %p117 = scmp.eq.s32.totalorder %s13, 3
    %p118 = scmp.ne.s32.totalorder %s113, %s115
    %p119 = scmp.eq.s32.totalorder %s13, 0
    %p120 = por %p118, %p119
    %p121 = scmp.ne.s32.totalorder %s113, %s115
    %p122 = scmp.eq.s32.totalorder %s18, 3
    %p123 = por %p121, %p122
    %p124 = scmp.ne.s32.totalorder %s115, %s116
    %p125 = scmp.eq.s32.totalorder %s18, 0
    %p126 = por %p124, %p125
    %p127 = scmp.ne.s32.totalorder %s115, %s116
    %p128 = scmp.eq.s32.totalorder %s19, 3
    %p129 = por %p127, %p128
    %p131 = scmp.ne.s32.totalorder %s116, %s130
    %p132 = scmp.eq.s32.totalorder %s19, 0
    %p133 = por %p131, %p132
    %s134 = ssub.s32 %s20, %s32
    %s135 = ssub.s32 %s21, %s28
    %s136 = sor.u32 %s134, %s135
    %p137 = scmp.eq.s32.totalorder %s136, 0
    %s139 = sadd.s32 %s138, 1
    %s140 = scalar_select %p137, %s138, %s139
    %p143 = pneg %p137
    %p144 = scmp.eq.s32.totalorder %s13, 3
    %p145 = por %p143, %p144
    %p146 = scmp.ne.s32.totalorder %s138, %s141
    %p147 = scmp.eq.s32.totalorder %s13, 0
    %p148 = por %p146, %p147
    %p149 = scmp.ne.s32.totalorder %s138, %s141
    %p150 = scmp.eq.s32.totalorder %s18, 3
    %p151 = por %p149, %p150
    %p152 = scmp.ne.s32.totalorder %s141, %s142
    %p153 = scmp.eq.s32.totalorder %s18, 0
    %p154 = por %p152, %p153
    %p155 = scmp.ne.s32.totalorder %s141, %s142
    %p156 = scmp.eq.s32.totalorder %s19, 3
    %p157 = por %p155, %p156
    %p159 = scmp.ne.s32.totalorder %s142, %s158
    %p160 = scmp.eq.s32.totalorder %s19, 0
    %p161 = por %p159, %p160
    %s162 = ssub.s32 %s20, %s32
    %p163 = scmp.eq.s32.totalorder %s162, 0
    %s165 = sadd.s32 %s164, 1
    %s166 = scalar_select %p163, %s164, %s165
    %p169 = pneg %p163
    %p170 = scmp.eq.s32.totalorder %s13, 3
    %p171 = por %p169, %p170
    %p172 = scmp.ne.s32.totalorder %s164, %s167
    %p173 = scmp.eq.s32.totalorder %s13, 0
    %p174 = por %p172, %p173
    %p175 = scmp.ne.s32.totalorder %s164, %s167
    %p176 = scmp.eq.s32.totalorder %s18, 3
    %p177 = por %p175, %p176
    %p178 = scmp.ne.s32.totalorder %s167, %s168
    %p179 = scmp.eq.s32.totalorder %s18, 0
    %p180 = por %p178, %p179
    %p181 = scmp.ne.s32.totalorder %s167, %s168
    %p182 = scmp.eq.s32.totalorder %s19, 3
    %p183 = por %p181, %p182
    %p185 = scmp.ne.s32.totalorder %s168, %s184
    %p186 = scmp.eq.s32.totalorder %s19, 0
    %p187 = por %p185, %p186
    %s188 = ssub.s32 %s20, %s32
    %p189 = scmp.eq.s32.totalorder %s188, 0
    %s191 = sadd.s32 %s190, 1
    %s192 = scalar_select %p189, %s190, %s191
    %p195 = pneg %p189
    %p196 = scmp.eq.s32.totalorder %s13, 3
    %p197 = por %p195, %p196
    %p198 = scmp.ne.s32.totalorder %s190, %s193
    %p199 = scmp.eq.s32.totalorder %s13, 0
    %p200 = por %p198, %p199
    %p201 = scmp.ne.s32.totalorder %s190, %s193
    %p202 = scmp.eq.s32.totalorder %s18, 3
    %p203 = por %p201, %p202
    %p204 = scmp.ne.s32.totalorder %s193, %s194
    %p205 = scmp.eq.s32.totalorder %s18, 0
    %p206 = por %p204, %p205
    %p207 = scmp.ne.s32.totalorder %s193, %s194
    %p208 = scmp.eq.s32.totalorder %s19, 3
    %p209 = por %p207, %p208
    %p211 = scmp.ne.s32.totalorder %s194, %s210
    %p212 = scmp.eq.s32.totalorder %s19, 0
    %p213 = por %p211, %p212
    %p214 = scmp.le.s32.totalorder 1, %s13
    %p215 = scmp.lt.s32.totalorder %s13, 5
    %p216 = pnand %p214, %p215
    %p217 = pneg %p216
    // Predicated region
    $region9: #{ppm_forward.4} parent=5 // pred_check
      _
    $region10: #{ppm_forward.4} parent=5 // pred_check_branch
      %219 = sbr.rel (%p216) target = $region12
    $region11: #{ppm_forward.4} parent=5 // pred_region
      %s220 = ssub.s32 %s13, 1
      // Predicated region
      $region13: #{ppm_forward.4} parent=11 // pred_check
        %p221 = pneg %p126
      $region14: #{ppm_forward.4} parent=11 // pred_check_branch
        %223 = sbr.rel (%p221) target = $region16
      $region15: #{ppm_forward.4} parent=11 // pred_region
        _
      $region16: #{ppm_forward.4} parent=11 // pred_fallthru
        _
    $region12: #{ppm_forward.4} parent=5 // pred_fallthru
      _
    %p224 = scmp.lt.s32.totalorder %s13, 4
    // Predicated region
    $region17: #{ppm_forward.4} parent=5 // pred_check
      %p225 = pneg %p224
    $region18: #{ppm_forward.4} parent=5 // pred_check_branch
      %227 = sbr.rel (%p225) target = $region20
    $region19: #{ppm_forward.4} parent=5 // pred_region
      // Predicated region
      $region21: #{ppm_forward.4} parent=19 // pred_check
        %p228 = pneg %p47
      $region22: #{ppm_forward.4} parent=19 // pred_check_branch
        %230 = sbr.rel (%p228) target = $region24
      $region23: #{ppm_forward.4} parent=19 // pred_region
        %s231 = smul.u32 16, %s21
        %p232 = scmp.lt.s32.totalorder %s20, 1
        %s233 = scalar_select %p232, %s20, 1
        %p234 = scmp.lt.s32.totalorder %s231, 31
        %s235 = scalar_select %p234, %s231, 31
        %s236 = smul.addr %s233, 32
        %s237 = sadd.s32 %s235, %s236
        %s238 = smul.addr %s237, 8
        %s239 = scalar_lea.vmem %s0, %s238
        %s240 = smul.u32 16, %s21
      $region24: #{ppm_forward.4} parent=19 // pred_fallthru
        _
      // Predicated region
      $region25: #{ppm_forward.4} parent=19 // pred_check
        %p241 = pneg %p73
      $region26: #{ppm_forward.4} parent=19 // pred_check_branch
        %243 = sbr.rel (%p241) target = $region28
      $region27: #{ppm_forward.4} parent=19 // pred_region
        %s244 = smul.u32 16, %s21
        %p245 = scmp.lt.s32.totalorder %s244, 31
        %s246 = scalar_select %p245, %s244, 31
        %s247 = smul.addr %s246, 8
        %s248 = scalar_lea.vmem %s1, %s247
        %s249 = smul.u32 16, %s21
      $region28: #{ppm_forward.4} parent=19 // pred_fallthru
        _
      // Predicated region
      $region29: #{ppm_forward.4} parent=19 // pred_check
        %p250 = pneg %p99
      $region30: #{ppm_forward.4} parent=19 // pred_check_branch
        %252 = sbr.rel (%p250) target = $region32
      $region31: #{ppm_forward.4} parent=19 // pred_region
        %p253 = scmp.lt.s32.totalorder %s20, 1
        %s254 = scalar_select %p253, %s20, 1
        %s255 = smul.addr %s254, 8
        %s256 = smul.addr %s255, 8
        %s257 = scalar_lea.vmem %s2, %s256
      $region32: #{ppm_forward.4} parent=19 // pred_fallthru
        _
    $region20: #{ppm_forward.4} parent=5 // pred_fallthru
      _
    %p258 = scmp.le.s32.totalorder 1, %s13
    %p259 = scmp.lt.s32.totalorder %s13, 5
    %p260 = pnand %p258, %p259
    %p261 = pneg %p260
    // Predicated region
    $region33: #{ppm_forward.4} parent=5 // pred_check
      _
    $region34: #{ppm_forward.4} parent=5 // pred_check_branch
      %263 = sbr.rel (%p260) target = $region36
    $region35: #{ppm_forward.4} parent=5 // pred_region
      %s264 = ssub.s32 %s13, 1
      %s265 = smul.u32 16, %s23
      %p266 = scmp.lt.s32.totalorder %s22, 1
      %s267 = scalar_select %p266, %s22, 1
      %p268 = scmp.lt.s32.totalorder %s265, 31
      %s269 = scalar_select %p268, %s265, 31
      %s270 = smul.addr %s267, 32
      %s271 = sadd.s32 %s269, %s270
      %s272 = smul.addr %s271, 8
      %s273 = scalar_lea.vmem %s0, %s272
      %p274 = pneg %p53
      %p275 = pneg %p50
      %s276 = smul.u32 16, %s23
      %p277 = scmp.lt.s32.totalorder %s276, 31
      %s278 = scalar_select %p277, %s276, 31
      %s279 = smul.addr %s278, 8
      %s280 = scalar_lea.vmem %s1, %s279
      %p281 = pneg %p79
      %p282 = pneg %p76
      %p283 = scmp.lt.s32.totalorder %s22, 1
      %s284 = scalar_select %p283, %s22, 1
      %s285 = smul.addr %s284, 8
      %s286 = smul.addr %s285, 8
      %s287 = scalar_lea.vmem %s2, %s286
      %p288 = pneg %p105
      %p289 = pneg %p102
      %p290 = pneg %p126
      %p291 = pneg %p123
      %p292 = pneg %p154
      %p293 = pneg %p151
      %s294 = smul.u32 16, %s23
      %p295 = scmp.lt.s32.totalorder %s22, 1
      %s296 = scalar_select %p295, %s22, 1
      %p297 = scmp.lt.s32.totalorder %s294, 31
      %s298 = scalar_select %p297, %s294, 31
      %s299 = smul.addr %s296, 32
      %s300 = sadd.s32 %s298, %s299
      %s301 = smul.addr %s300, 8
      %s302 = scalar_lea.vmem %s4, %s301
      %p303 = pneg %p180
      %p304 = pneg %p177
      %p305 = scmp.lt.s32.totalorder %s22, 1
      %s306 = scalar_select %p305, %s22, 1
      %s307 = scalar_lea.vmem %s5, %s306
      %p308 = pneg %p206
      %p309 = pneg %p203
      %p310 = scmp.lt.s32.totalorder %s22, 1
      %s311 = scalar_select %p310, %s22, 1
      %s312 = scalar_lea.vmem %s6, %s311
      %s313 = smul.u32 16, %s23
      %p314 = scmp.lt.s32.totalorder %s22, 1
      %s315 = scalar_select %p314, %s22, 1
      %p316 = scmp.lt.s32.totalorder %s313, 31
      %s317 = scalar_select %p316, %s313, 31
      %s318 = smul.addr %s315, 32
      %s319 = sadd.s32 %s317, %s318
      %s320 = smul.addr %s319, 8
      %s321 = scalar_lea.vmem %s0, %s320
      %s322 = smul.u32 16, %s23
      %s323 = smul.u32 16, %s23
      %p324 = scmp.lt.s32.totalorder %s323, 31
      %s325 = scalar_select %p324, %s323, 31
      %s326 = smul.addr %s325, 8
      %s327 = scalar_lea.vmem %s1, %s326
      %s328 = smul.u32 16, %s23
      %p329 = scmp.lt.s32.totalorder %s22, 1
      %s330 = scalar_select %p329, %s22, 1
      %s331 = smul.addr %s330, 8
      %s332 = smul.addr %s331, 8
      %s333 = scalar_lea.vmem %s2, %s332
      %s334 = smul.u32 16, %s23
      %p335 = scmp.lt.s32.totalorder %s22, 1
      %s336 = scalar_select %p335, %s22, 1
      %p337 = scmp.lt.s32.totalorder %s334, 31
      %s338 = scalar_select %p337, %s334, 31
      %s339 = smul.addr %s336, 32
      %s340 = sadd.s32 %s338, %s339
      %s341 = smul.addr %s340, 8
      %s342 = scalar_lea.vmem %s4, %s341
      %s343 = smul.u32 16, %s23
      %p344 = scmp.lt.s32.totalorder %s22, 1
      %s345 = scalar_select %p344, %s22, 1
      %s346 = scalar_lea.vmem %s5, %s345
      %p347 = scmp.lt.s32.totalorder %s22, 1
      %s348 = scalar_select %p347, %s22, 1
      %s349 = scalar_lea.vmem %s6, %s348
      %v350 = vld [vmem:[%s321] sm:$0xff]
      %v351 = vld [vmem:[%s321 + $0x8] sm:$0xff]
      %v352 = vld [vmem:[%s321 + $0x10] sm:$0xff]
      %v353 = vld [vmem:[%s321 + $0x18] sm:$0xff]
      %v354 = vld [vmem:[%s321 + $0x20] sm:$0xff]
      %v355 = vld [vmem:[%s321 + $0x28] sm:$0xff]
      %v356 = vld [vmem:[%s321 + $0x30] sm:$0xff]
      %v357 = vld [vmem:[%s321 + $0x38] sm:$0xff]
      %v358 = vld [vmem:[%s321 + $0x40] sm:$0xff]
      %v359 = vld [vmem:[%s321 + $0x48] sm:$0xff]
      %v360 = vld [vmem:[%s321 + $0x50] sm:$0xff]
      %v361 = vld [vmem:[%s321 + $0x58] sm:$0xff]
      %v362 = vld [vmem:[%s321 + $0x60] sm:$0xff]
      %v363 = vld [vmem:[%s321 + $0x68] sm:$0xff]
      %v364 = vld [vmem:[%s321 + $0x70] sm:$0xff]
      %v365 = vld [vmem:[%s321 + $0x78] sm:$0xff]
      %v366 = vld [vmem:[%s3] sm:$0xff]
      %v367 = vld [vmem:[%s3 + $0x8] sm:$0xff]
      %v368 = vld [vmem:[%s327] sm:$0xff]
      %v369 = vld [vmem:[%s327 + $0x8] sm:$0xff]
      %v370 = vld [vmem:[%s327 + $0x10] sm:$0xff]
      %v371 = vld [vmem:[%s327 + $0x18] sm:$0xff]
      %v372 = vld [vmem:[%s327 + $0x20] sm:$0xff]
      %v373 = vld [vmem:[%s327 + $0x28] sm:$0xff]
      %v374 = vld [vmem:[%s327 + $0x30] sm:$0xff]
      %v375 = vld [vmem:[%s327 + $0x38] sm:$0xff]
      %v376 = vld [vmem:[%s327 + $0x40] sm:$0xff]
      %v377 = vld [vmem:[%s327 + $0x48] sm:$0xff]
      %v378 = vld [vmem:[%s327 + $0x50] sm:$0xff]
      %v379 = vld [vmem:[%s327 + $0x58] sm:$0xff]
      %v380 = vld [vmem:[%s327 + $0x60] sm:$0xff]
      %v381 = vld [vmem:[%s327 + $0x68] sm:$0xff]
      %v382 = vld [vmem:[%s327 + $0x70] sm:$0xff]
      %v383 = vld [vmem:[%s327 + $0x78] sm:$0xff]
      %v384 = vld [vmem:[%s333] sm:$0xff]
      %v385 = vld [vmem:[%s333 + $0x8] sm:$0xff]
      %v386 = vld [vmem:[%s333 + $0x10] sm:$0xff]
      %v387 = vld [vmem:[%s333 + $0x18] sm:$0xff]
      %v388 = vld [vmem:[%s333 + $0x20] sm:$0xff]
      %v389 = vld [vmem:[%s333 + $0x28] sm:$0xff]
      %v390 = vld [vmem:[%s333 + $0x30] sm:$0xff]
      %v391 = vld [vmem:[%s333 + $0x38] sm:$0xff]
      %vm392 = vcmask 523264
      %v394 = vsel %vm392, %v368, 0
      %v397 = vsel %vm392, %v369, 0
      %v400 = vsel %vm392, %v370, 0
      %v403 = vsel %vm392, %v371, 0
      %v406 = vsel %vm392, %v372, 0
      %v409 = vsel %vm392, %v373, 0
      %v412 = vsel %vm392, %v374, 0
      %v415 = vsel %vm392, %v375, 0
      %v418 = vsel %vm392, %v376, 0
      %v421 = vsel %vm392, %v377, 0
      %v424 = vsel %vm392, %v378, 0
      %v427 = vsel %vm392, %v379, 0
      %v430 = vsel %vm392, %v380, 0
      %v433 = vsel %vm392, %v381, 0
      %v436 = vsel %vm392, %v382, 0
      %v439 = vsel %vm392, %v383, 0
      %441 = vmatprep.subr.mxu0 0.0
      %442 = vmatpush1.msra.mxu0 0.0
      %443 = vmatprep.subr.mxu0 0.0
      %444 = vmatpush1.msra.mxu0 0.0
      %445 = vmatprep.subr.mxu0 0.0
      %446 = vmatpush1.msra.mxu0 0.0
      %447 = vmatprep.subr.mxu0 0.0
      %448 = vmatpush1.msra.mxu0 0.0
      %449 = vmatprep.subr.mxu0 0.0
      %450 = vmatpush1.msra.mxu0 0.0
      %451 = vmatprep.subr.mxu0 0.0
      %452 = vmatpush1.msra.mxu0 0.0
      %453 = vmatprep.subr.mxu0 0.0
      %454 = vmatpush1.msra.mxu0 0.0
      %455 = vmatprep.subr.mxu0 0.0
      %456 = vmatpush1.msra.mxu0 0.0
      %457 = vmatprep.subr.mxu0 0.0
      %458 = vmatpush1.msra.mxu0 %v391
      %459 = vmatprep.subr.mxu0 0.0
      %460 = vmatpush1.msra.mxu0 %v390
      %461 = vmatprep.subr.mxu0 0.0
      %462 = vmatpush1.msra.mxu0 %v389
      %463 = vmatprep.subr.mxu0 0.0
      %464 = vmatpush1.msra.mxu0 %v388
      %465 = vmatprep.subr.mxu0 0.0
      %466 = vmatpush1.msra.mxu0 %v387
      %467 = vmatprep.subr.mxu0 0.0
      %468 = vmatpush1.msra.mxu0 %v386
      %469 = vmatprep.subr.mxu0 0.0
      %470 = vmatpush1.msra.mxu0 %v385
      %471 = vmatprep.subr.mxu0 0.0
      %472 = vmatpush1.msra.mxu0 %v384
      %473 = vmatprep.subr.mxu0 0.0
      %474 = vmatpush2.msra.mxu0 0.0
      %475 = vmatprep.subr.mxu0 0.0
      %476 = vmatpush2.msra.mxu0 0.0
      %477 = vmatprep.subr.mxu0 0.0
      %478 = vmatpush2.msra.mxu0 0.0
      %479 = vmatprep.subr.mxu0 0.0
      %480 = vmatpush2.msra.mxu0 0.0
      %481 = vmatprep.subr.mxu0 0.0
      %482 = vmatpush2.msra.mxu0 0.0
      %483 = vmatprep.subr.mxu0 0.0
      %484 = vmatpush2.msra.mxu0 0.0
      %485 = vmatprep.subr.mxu0 0.0
      %486 = vmatpush2.msra.mxu0 0.0
      %487 = vmatprep.subr.mxu0 0.0
      %488 = vmatpush2.msra.mxu0 0.0
      %489 = vmatprep.subr.mxu0 0.0
      %490 = vmatpush2.msra.mxu0 0.0
      %491 = vmatprep.subr.mxu0 0.0
      %492 = vmatpush2.msra.mxu0 0.0
      %493 = vmatprep.subr.mxu0 0.0
      %494 = vmatpush2.msra.mxu0 0.0
      %495 = vmatprep.subr.mxu0 0.0
      %496 = vmatpush2.msra.mxu0 0.0
      %497 = vmatprep.subr.mxu0 0.0
      %498 = vmatpush2.msra.mxu0 0.0
      %499 = vmatprep.subr.mxu0 0.0
      %500 = vmatpush2.msra.mxu0 0.0
      %501 = vmatprep.subr.mxu0 0.0
      %502 = vmatpush2.msra.mxu0 0.0
      %503 = vmatprep.subr.mxu0 0.0
      %504 = vmatpush2.msra.mxu0 0.0
      %505 = vmatprep.mubr.f32.mxu0 0.0
      %506 = vmatmul.mubr.f32.gmra.mxu0 %v394
      %v507 = vpop.f32.mrf.mxu0
      %v508 = vadd.f32 0.0, %v507
      %v509 = vpop.f32.mrf.mxu0
      %510 = vmatprep.mubr.f32.mxu0 0.0
      %511 = vmatmul.mubr.f32.gmra.mxu0 %v397
      %v512 = vpop.f32.mrf.mxu0
      %v513 = vadd.f32 0.0, %v512
      %v514 = vpop.f32.mrf.mxu0
      %515 = vmatprep.mubr.f32.mxu0 0.0
      %516 = vmatmul.mubr.f32.gmra.mxu0 %v400
      %v517 = vpop.f32.mrf.mxu0
      %v518 = vadd.f32 0.0, %v517
      %v519 = vpop.f32.mrf.mxu0
      %520 = vmatprep.mubr.f32.mxu0 0.0
      %521 = vmatmul.mubr.f32.gmra.mxu0 %v403
      %v522 = vpop.f32.mrf.mxu0
      %v523 = vadd.f32 0.0, %v522
      %v524 = vpop.f32.mrf.mxu0
      %525 = vmatprep.mubr.f32.mxu0 0.0
      %526 = vmatmul.mubr.f32.gmra.mxu0 %v406
      %v527 = vpop.f32.mrf.mxu0
      %v528 = vadd.f32 0.0, %v527
      %v529 = vpop.f32.mrf.mxu0
      %530 = vmatprep.mubr.f32.mxu0 0.0
      %531 = vmatmul.mubr.f32.gmra.mxu0 %v409
      %v532 = vpop.f32.mrf.mxu0
      %v533 = vadd.f32 0.0, %v532
      %v534 = vpop.f32.mrf.mxu0
      %535 = vmatprep.mubr.f32.mxu0 0.0
      %536 = vmatmul.mubr.f32.gmra.mxu0 %v412
      %v537 = vpop.f32.mrf.mxu0
      %v538 = vadd.f32 0.0, %v537
      %v539 = vpop.f32.mrf.mxu0
      %540 = vmatprep.mubr.f32.mxu0 0.0
      %541 = vmatmul.mubr.f32.gmra.mxu0 %v415
      %v542 = vpop.f32.mrf.mxu0
      %v543 = vadd.f32 0.0, %v542
      %v544 = vpop.f32.mrf.mxu0
      %545 = vmatprep.mubr.f32.mxu0 0.0
      %546 = vmatmul.mubr.f32.gmra.mxu0 %v418
      %v547 = vpop.f32.mrf.mxu0
      %v548 = vadd.f32 0.0, %v547
      %v549 = vpop.f32.mrf.mxu0
      %550 = vmatprep.mubr.f32.mxu0 0.0
      %551 = vmatmul.mubr.f32.gmra.mxu0 %v421
      %v552 = vpop.f32.mrf.mxu0
      %v553 = vadd.f32 0.0, %v552
      %v554 = vpop.f32.mrf.mxu0
      %555 = vmatprep.mubr.f32.mxu0 0.0
      %556 = vmatmul.mubr.f32.gmra.mxu0 %v424
      %v557 = vpop.f32.mrf.mxu0
      %v558 = vadd.f32 0.0, %v557
      %v559 = vpop.f32.mrf.mxu0
      %560 = vmatprep.mubr.f32.mxu0 0.0
      %561 = vmatmul.mubr.f32.gmra.mxu0 %v427
      %v562 = vpop.f32.mrf.mxu0
      %v563 = vadd.f32 0.0, %v562
      %v564 = vpop.f32.mrf.mxu0
      %565 = vmatprep.mubr.f32.mxu0 0.0
      %566 = vmatmul.mubr.f32.gmra.mxu0 %v430
      %v567 = vpop.f32.mrf.mxu0
      %v568 = vadd.f32 0.0, %v567
      %v569 = vpop.f32.mrf.mxu0
      %570 = vmatprep.mubr.f32.mxu0 0.0
      %571 = vmatmul.mubr.f32.gmra.mxu0 %v433
      %v572 = vpop.f32.mrf.mxu0
      %v573 = vadd.f32 0.0, %v572
      %v574 = vpop.f32.mrf.mxu0
      %575 = vmatprep.mubr.f32.mxu0 0.0
      %576 = vmatmul.mubr.f32.gmra.mxu0 %v436
      %v577 = vpop.f32.mrf.mxu0
      %v578 = vadd.f32 0.0, %v577
      %v579 = vpop.f32.mrf.mxu0
      %580 = vmatprep.mubr.f32.mxu0 0.0
      %581 = vmatmul.mubr.f32.gmra.mxu0 %v439
      %v582 = vpop.f32.mrf.mxu0
      %v583 = vadd.f32 0.0, %v582
      %v584 = vpop.f32.mrf.mxu0
      %585 = vdwg.mxu0
      %vm586 = vcmask 130048
      %v588 = vsel %vm586, %v350, 0
      %v591 = vsel %vm586, %v351, 0
      %v594 = vsel %vm586, %v352, 0
      %v597 = vsel %vm586, %v353, 0
      %v600 = vsel %vm586, %v354, 0
      %v603 = vsel %vm586, %v355, 0
      %v606 = vsel %vm586, %v356, 0
      %v609 = vsel %vm586, %v357, 0
      %v612 = vsel %vm586, %v358, 0
      %v615 = vsel %vm586, %v359, 0
      %v618 = vsel %vm586, %v360, 0
      %v621 = vsel %vm586, %v361, 0
      %v624 = vsel %vm586, %v362, 0
      %v627 = vsel %vm586, %v363, 0
      %v630 = vsel %vm586, %v364, 0
      %v633 = vsel %vm586, %v365, 0
      %635 = vmatprep.subr.mxu0 0.0
      %636 = vmatpush1.msra.mxu0 0.0
      %637 = vmatprep.subr.mxu0 0.0
      %638 = vmatpush1.msra.mxu0 0.0
      %639 = vmatprep.subr.mxu0 0.0
      %640 = vmatpush1.msra.mxu0 0.0
      %641 = vmatprep.subr.mxu0 0.0
      %642 = vmatpush1.msra.mxu0 0.0
      %643 = vmatprep.subr.mxu0 0.0
      %644 = vmatpush1.msra.mxu0 0.0
      %645 = vmatprep.subr.mxu0 0.0
      %646 = vmatpush1.msra.mxu0 0.0
      %647 = vmatprep.subr.mxu0 0.0
      %648 = vmatpush1.msra.mxu0 0.0
      %649 = vmatprep.subr.mxu0 0.0
      %650 = vmatpush1.msra.mxu0 0.0
      %651 = vmatprep.subr.mxu0 0.0
      %652 = vmatpush1.msra.mxu0 0.0
      %653 = vmatprep.subr.mxu0 0.0
      %654 = vmatpush1.msra.mxu0 0.0
      %655 = vmatprep.subr.mxu0 0.0
      %656 = vmatpush1.msra.mxu0 0.0
      %657 = vmatprep.subr.mxu0 0.0
      %658 = vmatpush1.msra.mxu0 0.0
      %659 = vmatprep.subr.mxu0 0.0
      %660 = vmatpush1.msra.mxu0 0.0
      %661 = vmatprep.subr.mxu0 0.0
      %662 = vmatpush1.msra.mxu0 0.0
      %663 = vmatprep.subr.mxu0 0.0
      %664 = vmatpush1.msra.mxu0 %v367
      %665 = vmatprep.subr.mxu0 0.0
      %666 = vmatpush1.msra.mxu0 %v366
      %667 = vmatprep.subr.mxu0 0.0
      %668 = vmatpush2.msra.mxu0 0.0
      %669 = vmatprep.subr.mxu0 0.0
      %670 = vmatpush2.msra.mxu0 0.0
      %671 = vmatprep.subr.mxu0 0.0
      %672 = vmatpush2.msra.mxu0 0.0
      %673 = vmatprep.subr.mxu0 0.0
      %674 = vmatpush2.msra.mxu0 0.0
      %675 = vmatprep.subr.mxu0 0.0
      %676 = vmatpush2.msra.mxu0 0.0
      %677 = vmatprep.subr.mxu0 0.0
      %678 = vmatpush2.msra.mxu0 0.0
      %679 = vmatprep.subr.mxu0 0.0
      %680 = vmatpush2.msra.mxu0 0.0
      %681 = vmatprep.subr.mxu0 0.0
      %682 = vmatpush2.msra.mxu0 0.0
      %683 = vmatprep.subr.mxu0 0.0
      %684 = vmatpush2.msra.mxu0 0.0
      %685 = vmatprep.subr.mxu0 0.0
      %686 = vmatpush2.msra.mxu0 0.0
      %687 = vmatprep.subr.mxu0 0.0
      %688 = vmatpush2.msra.mxu0 0.0
      %689 = vmatprep.subr.mxu0 0.0
      %690 = vmatpush2.msra.mxu0 0.0
      %691 = vmatprep.subr.mxu0 0.0
      %692 = vmatpush2.msra.mxu0 0.0
      %693 = vmatprep.subr.mxu0 0.0
      %694 = vmatpush2.msra.mxu0 0.0
      %695 = vmatprep.subr.mxu0 0.0
      %696 = vmatpush2.msra.mxu0 0.0
      %697 = vmatprep.subr.mxu0 0.0
      %698 = vmatpush2.msra.mxu0 0.0
      %699 = vmatprep.mubr.f32.mxu0 0.0
      %700 = vmatmul.mubr.f32.gmra.mxu0 %v588
      %v701 = vpop.f32.mrf.mxu0
      %v702 = vadd.f32 %v508, %v701
      %v703 = vpop.f32.mrf.mxu0
      %704 = vmatprep.mubr.f32.mxu0 0.0
      %705 = vmatmul.mubr.f32.gmra.mxu0 %v591
      %v706 = vpop.f32.mrf.mxu0
      %v707 = vadd.f32 %v513, %v706
      %v708 = vpop.f32.mrf.mxu0
      %709 = vmatprep.mubr.f32.mxu0 0.0
      %710 = vmatmul.mubr.f32.gmra.mxu0 %v594
      %v711 = vpop.f32.mrf.mxu0
      %v712 = vadd.f32 %v518, %v711
      %v713 = vpop.f32.mrf.mxu0
      %714 = vmatprep.mubr.f32.mxu0 0.0
      %715 = vmatmul.mubr.f32.gmra.mxu0 %v597
      %v716 = vpop.f32.mrf.mxu0
      %v717 = vadd.f32 %v523, %v716
      %v718 = vpop.f32.mrf.mxu0
      %719 = vmatprep.mubr.f32.mxu0 0.0
      %720 = vmatmul.mubr.f32.gmra.mxu0 %v600
      %v721 = vpop.f32.mrf.mxu0
      %v722 = vadd.f32 %v528, %v721
      %v723 = vpop.f32.mrf.mxu0
      %724 = vmatprep.mubr.f32.mxu0 0.0
      %725 = vmatmul.mubr.f32.gmra.mxu0 %v603
      %v726 = vpop.f32.mrf.mxu0
      %v727 = vadd.f32 %v533, %v726
      %v728 = vpop.f32.mrf.mxu0
      %729 = vmatprep.mubr.f32.mxu0 0.0
      %730 = vmatmul.mubr.f32.gmra.mxu0 %v606
      %v731 = vpop.f32.mrf.mxu0
      %v732 = vadd.f32 %v538, %v731
      %v733 = vpop.f32.mrf.mxu0
      %734 = vmatprep.mubr.f32.mxu0 0.0
      %735 = vmatmul.mubr.f32.gmra.mxu0 %v609
      %v736 = vpop.f32.mrf.mxu0
      %v737 = vadd.f32 %v543, %v736
      %v738 = vpop.f32.mrf.mxu0
      %739 = vmatprep.mubr.f32.mxu0 0.0
      %740 = vmatmul.mubr.f32.gmra.mxu0 %v612
      %v741 = vpop.f32.mrf.mxu0
      %v742 = vadd.f32 %v548, %v741
      %v743 = vpop.f32.mrf.mxu0
      %744 = vmatprep.mubr.f32.mxu0 0.0
      %745 = vmatmul.mubr.f32.gmra.mxu0 %v615
      %v746 = vpop.f32.mrf.mxu0
      %v747 = vadd.f32 %v553, %v746
      %v748 = vpop.f32.mrf.mxu0
      %749 = vmatprep.mubr.f32.mxu0 0.0
      %750 = vmatmul.mubr.f32.gmra.mxu0 %v618
      %v751 = vpop.f32.mrf.mxu0
      %v752 = vadd.f32 %v558, %v751
      %v753 = vpop.f32.mrf.mxu0
      %754 = vmatprep.mubr.f32.mxu0 0.0
      %755 = vmatmul.mubr.f32.gmra.mxu0 %v621
      %v756 = vpop.f32.mrf.mxu0
      %v757 = vadd.f32 %v563, %v756
      %v758 = vpop.f32.mrf.mxu0
      %759 = vmatprep.mubr.f32.mxu0 0.0
      %760 = vmatmul.mubr.f32.gmra.mxu0 %v624
      %v761 = vpop.f32.mrf.mxu0
      %v762 = vadd.f32 %v568, %v761
      %v763 = vpop.f32.mrf.mxu0
      %764 = vmatprep.mubr.f32.mxu0 0.0
      %765 = vmatmul.mubr.f32.gmra.mxu0 %v627
      %v766 = vpop.f32.mrf.mxu0
      %v767 = vadd.f32 %v573, %v766
      %v768 = vpop.f32.mrf.mxu0
      %769 = vmatprep.mubr.f32.mxu0 0.0
      %770 = vmatmul.mubr.f32.gmra.mxu0 %v630
      %v771 = vpop.f32.mrf.mxu0
      %v772 = vadd.f32 %v578, %v771
      %v773 = vpop.f32.mrf.mxu0
      %774 = vmatprep.mubr.f32.mxu0 0.0
      %775 = vmatmul.mubr.f32.gmra.mxu0 %v633
      %v776 = vpop.f32.mrf.mxu0
      %v777 = vadd.f32 %v583, %v776
      %v778 = vpop.f32.mrf.mxu0
      %779 = vdwg.mxu0
      %vm780 = vcmask 261120
      %781 = vst.msk [vmem:[%s342] sm:$0xff] %vm780, %v702
      %782 = vst.msk [vmem:[%s342 + $0x8] sm:$0xff] %vm780, %v707
      %783 = vst.msk [vmem:[%s342 + $0x10] sm:$0xff] %vm780, %v712
      %784 = vst.msk [vmem:[%s342 + $0x18] sm:$0xff] %vm780, %v717
      %785 = vst.msk [vmem:[%s342 + $0x20] sm:$0xff] %vm780, %v722
      %786 = vst.msk [vmem:[%s342 + $0x28] sm:$0xff] %vm780, %v727
      %787 = vst.msk [vmem:[%s342 + $0x30] sm:$0xff] %vm780, %v732
      %788 = vst.msk [vmem:[%s342 + $0x38] sm:$0xff] %vm780, %v737
      %789 = vst.msk [vmem:[%s342 + $0x40] sm:$0xff] %vm780, %v742
      %790 = vst.msk [vmem:[%s342 + $0x48] sm:$0xff] %vm780, %v747
      %791 = vst.msk [vmem:[%s342 + $0x50] sm:$0xff] %vm780, %v752
      %792 = vst.msk [vmem:[%s342 + $0x58] sm:$0xff] %vm780, %v757
      %793 = vst.msk [vmem:[%s342 + $0x60] sm:$0xff] %vm780, %v762
      %794 = vst.msk [vmem:[%s342 + $0x68] sm:$0xff] %vm780, %v767
      %795 = vst.msk [vmem:[%s342 + $0x70] sm:$0xff] %vm780, %v772
      %796 = vst.msk [vmem:[%s342 + $0x78] sm:$0xff] %vm780, %v777
      %p797 = scmp.eq.s32.totalorder %s23, 0
      // Predicated region
      $region37: #{ppm_forward.4} parent=35 // pred_check
        %p798 = pneg %p797
      $region38: #{ppm_forward.4} parent=35 // pred_check_branch
        %800 = sbr.rel (%p798) target = $region40
      $region39: #{ppm_forward.4} parent=35 // pred_region
        %vm801 = vcmask 253952
        %802 = vst.msk [vmem:[%s346] sm:$0x1] %vm801, 0.0
        %803 = vst.msk [vmem:[%s349] sm:$0x1] %vm801, 0.0
      $region40: #{ppm_forward.4} parent=35 // pred_fallthru
        _
      %v804 = vld [vmem:[%s346] sm:$0x1]
      %v805 = vsel %vm780, %v702, 0.0
      %v806 = vsel %vm780, %v707, 0.0
      %v807 = vadd.f32 %v805, %v806
      %v808 = vsel %vm780, %v712, 0.0
      %v809 = vadd.f32 %v807, %v808
      %v810 = vsel %vm780, %v717, 0.0
      %v811 = vadd.f32 %v809, %v810
      %v812 = vsel %vm780, %v722, 0.0
      %v813 = vadd.f32 %v811, %v812
      %v814 = vsel %vm780, %v727, 0.0
      %v815 = vadd.f32 %v813, %v814
      %v816 = vsel %vm780, %v732, 0.0
      %v817 = vadd.f32 %v815, %v816
      %v818 = vsel %vm780, %v737, 0.0
      %v819 = vadd.f32 %v817, %v818
      %v820 = vsel %vm780, %v742, 0.0
      %v821 = vadd.f32 %v819, %v820
      %v822 = vsel %vm780, %v747, 0.0
      %v823 = vadd.f32 %v821, %v822
      %v824 = vsel %vm780, %v752, 0.0
      %v825 = vadd.f32 %v823, %v824
      %v826 = vsel %vm780, %v757, 0.0
      %v827 = vadd.f32 %v825, %v826
      %v828 = vsel %vm780, %v762, 0.0
      %v829 = vadd.f32 %v827, %v828
      %v830 = vsel %vm780, %v767, 0.0
      %v831 = vadd.f32 %v829, %v830
      %v832 = vsel %vm780, %v772, 0.0
      %v833 = vadd.f32 %v831, %v832
      %v834 = vsel %vm780, %v777, 0.0
      %v835 = vadd.f32 %v833, %v834
      %v836 = vrot.slane %v835, 4
      %v837 = vadd.f32 %v835, %v836
      %v838 = vrot.slane %v837, 2
      %v839 = vadd.f32 %v837, %v838
      %v840 = vrot.slane %v839, 1
      %v841 = vadd.f32 %v839, %v840
      %v842 = vadd.f32 %v804, %v841
      %vm843 = vcmask 253952
      %844 = vst.msk [vmem:[%s346] sm:$0x1] %vm843, %v842
      %v845 = vld [vmem:[%s349] sm:$0x1]
      %v846 = vmul.f32 %v702, %v702
      %v847 = vmul.f32 %v707, %v707
      %v848 = vmul.f32 %v712, %v712
      %v849 = vmul.f32 %v717, %v717
      %v850 = vmul.f32 %v722, %v722
      %v851 = vmul.f32 %v727, %v727
      %v852 = vmul.f32 %v732, %v732
      %v853 = vmul.f32 %v737, %v737
      %v854 = vmul.f32 %v742, %v742
      %v855 = vmul.f32 %v747, %v747
      %v856 = vmul.f32 %v752, %v752
      %v857 = vmul.f32 %v757, %v757
      %v858 = vmul.f32 %v762, %v762
      %v859 = vmul.f32 %v767, %v767
      %v860 = vmul.f32 %v772, %v772
      %v861 = vmul.f32 %v777, %v777
      %v862 = vsel %vm780, %v846, 0.0
      %v863 = vsel %vm780, %v847, 0.0
      %v864 = vadd.f32 %v862, %v863
      %v865 = vsel %vm780, %v848, 0.0
      %v866 = vadd.f32 %v864, %v865
      %v867 = vsel %vm780, %v849, 0.0
      %v868 = vadd.f32 %v866, %v867
      %v869 = vsel %vm780, %v850, 0.0
      %v870 = vadd.f32 %v868, %v869
      %v871 = vsel %vm780, %v851, 0.0
      %v872 = vadd.f32 %v870, %v871
      %v873 = vsel %vm780, %v852, 0.0
      %v874 = vadd.f32 %v872, %v873
      %v875 = vsel %vm780, %v853, 0.0
      %v876 = vadd.f32 %v874, %v875
      %v877 = vsel %vm780, %v854, 0.0
      %v878 = vadd.f32 %v876, %v877
      %v879 = vsel %vm780, %v855, 0.0
      %v880 = vadd.f32 %v878, %v879
      %v881 = vsel %vm780, %v856, 0.0
      %v882 = vadd.f32 %v880, %v881
      %v883 = vsel %vm780, %v857, 0.0
      %v884 = vadd.f32 %v882, %v883
      %v885 = vsel %vm780, %v858, 0.0
      %v886 = vadd.f32 %v884, %v885
      %v887 = vsel %vm780, %v859, 0.0
      %v888 = vadd.f32 %v886, %v887
      %v889 = vsel %vm780, %v860, 0.0
      %v890 = vadd.f32 %v888, %v889
      %v891 = vsel %vm780, %v861, 0.0
      %v892 = vadd.f32 %v890, %v891
      %v893 = vrot.slane %v892, 4
      %v894 = vadd.f32 %v892, %v893
      %v895 = vrot.slane %v894, 2
      %v896 = vadd.f32 %v894, %v895
      %v897 = vrot.slane %v896, 1
      %v898 = vadd.f32 %v896, %v897
      %v899 = vadd.f32 %v845, %v898
      %900 = vst.msk [vmem:[%s349] sm:$0x1] %vm843, %v899
      %s901 = smul.u32 16, %s23
      %p902 = scmp.lt.s32.totalorder %s22, 1
      %s903 = scalar_select %p902, %s22, 1
      %p904 = scmp.lt.s32.totalorder %s901, 31
      %s905 = scalar_select %p904, %s901, 31
      %s906 = smul.addr %s903, 32
      %s907 = sadd.s32 %s905, %s906
      %s908 = smul.addr %s907, 8
      %s909 = scalar_lea.vmem %s4, %s908
      %p910 = scmp.lt.s32.totalorder %s22, 1
      %s911 = scalar_select %p910, %s22, 1
      %s912 = scalar_lea.vmem %s5, %s911
      %p913 = scmp.lt.s32.totalorder %s22, 1
      %s914 = scalar_select %p913, %s22, 1
      %s915 = scalar_lea.vmem %s6, %s914
      // Predicated region
      $region41: #{ppm_forward.4} parent=35 // pred_check
        %p916 = pneg %p151
      $region42: #{ppm_forward.4} parent=35 // pred_check_branch
        %918 = sbr.rel (%p916) target = $region44
      $region43: #{ppm_forward.4} parent=35 // pred_region
        %s919 = smul.u32 16, %s23
      $region44: #{ppm_forward.4} parent=35 // pred_fallthru
        _
      // Predicated region
      $region45: #{ppm_forward.4} parent=35 // pred_check
        %p920 = pneg %p177
      $region46: #{ppm_forward.4} parent=35 // pred_check_branch
        %922 = sbr.rel (%p920) target = $region48
      $region47: #{ppm_forward.4} parent=35 // pred_region
        _
      $region48: #{ppm_forward.4} parent=35 // pred_fallthru
        _
      // Predicated region
      $region49: #{ppm_forward.4} parent=35 // pred_check
        %p923 = pneg %p203
      $region50: #{ppm_forward.4} parent=35 // pred_check_branch
        %925 = sbr.rel (%p923) target = $region52
      $region51: #{ppm_forward.4} parent=35 // pred_region
        _
      $region52: #{ppm_forward.4} parent=35 // pred_fallthru
        _
    $region36: #{ppm_forward.4} parent=5 // pred_fallthru
      _
    %p926 = scmp.le.s32.totalorder 2, %s13
    // Predicated region
    $region53: #{ppm_forward.4} parent=5 // pred_check
      %p927 = pneg %p926
    $region54: #{ppm_forward.4} parent=5 // pred_check_branch
      %929 = sbr.rel (%p927) target = $region56
    $region55: #{ppm_forward.4} parent=5 // pred_region
      %s930 = ssub.s32 %s13, 2
      // Predicated region
      $region57: #{ppm_forward.4} parent=55 // pred_check
        %p931 = pneg %p157
      $region58: #{ppm_forward.4} parent=55 // pred_check_branch
        %933 = sbr.rel (%p931) target = $region60
      $region59: #{ppm_forward.4} parent=55 // pred_region
        %s934 = smul.u32 16, %s25
        %p935 = scmp.lt.s32.totalorder %s24, 1
        %s936 = scalar_select %p935, %s24, 1
        %p937 = scmp.lt.s32.totalorder %s934, 31
        %s938 = scalar_select %p937, %s934, 31
        %s939 = smul.addr %s936, 32
        %s940 = sadd.s32 %s938, %s939
        %s941 = smul.addr %s940, 8
        %s942 = scalar_lea.vmem %s4, %s941
      $region60: #{ppm_forward.4} parent=55 // pred_fallthru
        _
      // Predicated region
      $region61: #{ppm_forward.4} parent=55 // pred_check
        %p943 = pneg %p183
      $region62: #{ppm_forward.4} parent=55 // pred_check_branch
        %945 = sbr.rel (%p943) target = $region64
      $region63: #{ppm_forward.4} parent=55 // pred_region
        %p946 = scmp.lt.s32.totalorder %s24, 1
        %s947 = scalar_select %p946, %s24, 1
        %s948 = scalar_lea.vmem %s5, %s947
      $region64: #{ppm_forward.4} parent=55 // pred_fallthru
        _
      // Predicated region
      $region65: #{ppm_forward.4} parent=55 // pred_check
        %p949 = pneg %p209
      $region66: #{ppm_forward.4} parent=55 // pred_check_branch
        %951 = sbr.rel (%p949) target = $region68
      $region67: #{ppm_forward.4} parent=55 // pred_region
        %p952 = scmp.lt.s32.totalorder %s24, 1
        %s953 = scalar_select %p952, %s24, 1
        %s954 = scalar_lea.vmem %s6, %s953
      $region68: #{ppm_forward.4} parent=55 // pred_fallthru
        _
    $region56: #{ppm_forward.4} parent=5 // pred_fallthru
      _
  $region6: #{ppm_forward.4} parent=0 // loop_footer
    %s17 = sadd.s32 1, %s13
  $region7: #{ppm_forward.4} parent=0 // loop_footer_branch
    %12 = sbr.rel target = $region3
  $region8: #{ppm_forward.4} parent=0 // loop_exit
    _

// kernel: ppm_forward.5
$region0: #{ppm_forward.5}
  #allocation0 [shape = 'u32[]', space=smem, size = 0x4, offset = 0x4, fixed_abs, tag = 'smem constant byte address 0x4 - core index']
  #allocation1 [shape = 'u32[144,128]{1,0:T(1,128)}', space=vmem, size = 0x12000, scoped, tag = 'internal scratch']
  %s0 = inlined_call_operand.vmem [shape: f32[2,256,32], index: 0, kind: input, shape index: {}]
  %s1 = inlined_call_operand.vmem [shape: f32[1,32], index: 1, kind: input, shape index: {}]
  %s2 = inlined_call_operand.vmem [shape: f32[1,32], index: 2, kind: input, shape index: {}]
  %s3 = inlined_call_operand.hbm [shape: f32[2,256,32], index: 3, kind: output, shape index: {}]
  %s4 = sld [smem:[#allocation0]]
  $region45: #{ppm_forward.5} parent=0
    _
  %s6 = ssub.s32 1, %s4
  %s7 = scalar_select 0, %s6, %s4
  $region1: #{ppm_forward.5} parent=0
    #allocation2 [shape = 'u8[131072]{0}', space=vmem, size = 0x20000, scoped, tag = 'output window, operand 0']
    #allocation3 [shape = 's32[2]{0}', space=sflag, size = 0x8, scoped, tag = 'scoped memory for ppm_forward.5']
    %8 = vsyncpa [#allocation3], 0
    %s9 = scalar_lea.sflag [#allocation3], 1
    %10 = vsyncpa %s9, 0
    loop: start=0, step=1, limit=6
    $region2: #{ppm_forward.5} parent=1 // loop_pre_header
      _
    $region3: #{ppm_forward.5} parent=1 // loop_header
      %s12 = sphi 0, %s16
      %p13 = scmp.ge.s32.totalorder %s12, 6
      %s19 = sphi 0, %s31
      %s20 = sphi 0, %s27
      %s21 = sphi 0, %s19
      %s22 = sphi 0, %s20
      %s23 = sphi 0, %s21
      %s24 = sphi 0, %s22
      %s36 = sphi 0, %s38
      %s39 = sphi 0, %s36
      %s40 = sphi 0, %s39
      %s56 = sphi 0, %s40
      %s60 = sphi 0, %s60
      %s62 = sphi 0, %s60
      %s63 = sphi 0, %s62
      %s77 = sphi 0, %s63
      %s81 = sphi 0, %s81
      %s83 = sphi 0, %s81
      %s84 = sphi 0, %s83
      %s98 = sphi 0, %s84
      %s106 = sphi 0, %s108
      %s109 = sphi 0, %s106
      %s110 = sphi 0, %s109
      %s126 = sphi 0, %s110
    $region4: #{ppm_forward.5} parent=1 // loop_header_branch
      %15 = sbr.rel (%p13) target = $region8
    $region5: #{ppm_forward.5} parent=1 // loop_body
      %s17 = ssub.s32 %s12, 1
      %s18 = ssub.s32 %s12, 2
      %s25 = sadd.s32 1, %s20
      %p26 = scmp.ge.s32.totalorder %s25, 2
      %s27 = scalar_select %p26, 0, %s25
      %s28 = sadd.s32 1, %s19
      %s29 = scalar_select %p26, %s28, %s19
      %p30 = scmp.ge.s32.totalorder %s29, 2
      %s31 = scalar_select %p30, 0, %s29
      %s32 = ssub.s32 %s19, %s31
      %s33 = ssub.s32 %s20, %s27
      %s34 = sor.u32 %s32, %s33
      %p35 = scmp.eq.s32.totalorder %s34, 0
      %s37 = sadd.s32 %s36, 1
      %s38 = scalar_select %p35, %s36, %s37
      %p41 = pneg %p35
      %p42 = scmp.eq.s32.totalorder %s12, 3
      %p43 = por %p41, %p42
      %p44 = scmp.ne.s32.totalorder %s36, %s39
      %p45 = scmp.eq.s32.totalorder %s12, 0
      %p46 = por %p44, %p45
      %p47 = scmp.ne.s32.totalorder %s36, %s39
      %p48 = scmp.eq.s32.totalorder %s17, 3
      %p49 = por %p47, %p48
      %p50 = scmp.ne.s32.totalorder %s39, %s40
      %p51 = scmp.eq.s32.totalorder %s17, 0
      %p52 = por %p50, %p51
      %p53 = scmp.ne.s32.totalorder %s39, %s40
      %p54 = scmp.eq.s32.totalorder %s18, 3
      %p55 = por %p53, %p54
      %p57 = scmp.ne.s32.totalorder %s40, %s56
      %p58 = scmp.eq.s32.totalorder %s18, 0
      %p59 = por %p57, %p58
      %s61 = sadd.s32 %s60, 1
      %p64 = scmp.eq.s32.totalorder %s12, 3
      %p65 = scmp.ne.s32.totalorder %s60, %s62
      %p66 = scmp.eq.s32.totalorder %s12, 0
      %p67 = por %p65, %p66
      %p68 = scmp.ne.s32.totalorder %s60, %s62
      %p69 = scmp.eq.s32.totalorder %s17, 3
      %p70 = por %p68, %p69
      %p71 = scmp.ne.s32.totalorder %s62, %s63
      %p72 = scmp.eq.s32.totalorder %s17, 0
      %p73 = por %p71, %p72
      %p74 = scmp.ne.s32.totalorder %s62, %s63
      %p75 = scmp.eq.s32.totalorder %s18, 3
      %p76 = por %p74, %p75
      %p78 = scmp.ne.s32.totalorder %s63, %s77
      %p79 = scmp.eq.s32.totalorder %s18, 0
      %p80 = por %p78, %p79
      %s82 = sadd.s32 %s81, 1
      %p85 = scmp.eq.s32.totalorder %s12, 3
      %p86 = scmp.ne.s32.totalorder %s81, %s83
      %p87 = scmp.eq.s32.totalorder %s12, 0
      %p88 = por %p86, %p87
      %p89 = scmp.ne.s32.totalorder %s81, %s83
      %p90 = scmp.eq.s32.totalorder %s17, 3
      %p91 = por %p89, %p90
      %p92 = scmp.ne.s32.totalorder %s83, %s84
      %p93 = scmp.eq.s32.totalorder %s17, 0
      %p94 = por %p92, %p93
      %p95 = scmp.ne.s32.totalorder %s83, %s84
      %p96 = scmp.eq.s32.totalorder %s18, 3
      %p97 = por %p95, %p96
      %p99 = scmp.ne.s32.totalorder %s84, %s98
      %p100 = scmp.eq.s32.totalorder %s18, 0
      %p101 = por %p99, %p100
      %s102 = ssub.s32 %s19, %s31
      %s103 = ssub.s32 %s20, %s27
      %s104 = sor.u32 %s102, %s103
      %p105 = scmp.eq.s32.totalorder %s104, 0
      %s107 = sadd.s32 %s106, 1
      %s108 = scalar_select %p105, %s106, %s107
      %p111 = pneg %p105
      %p112 = scmp.eq.s32.totalorder %s12, 3
      %p113 = por %p111, %p112
      %p114 = scmp.ne.s32.totalorder %s106, %s109
      %p115 = scmp.eq.s32.totalorder %s12, 0
      %p116 = por %p114, %p115
      %p117 = scmp.ne.s32.totalorder %s106, %s109
      %p118 = scmp.eq.s32.totalorder %s17, 3
      %p119 = por %p117, %p118
      %p120 = scmp.ne.s32.totalorder %s109, %s110
      %p121 = scmp.eq.s32.totalorder %s17, 0
      %p122 = por %p120, %p121
      %p123 = scmp.ne.s32.totalorder %s109, %s110
      %p124 = scmp.eq.s32.totalorder %s18, 3
      %p125 = por %p123, %p124
      %p127 = scmp.ne.s32.totalorder %s110, %s126
      %p128 = scmp.eq.s32.totalorder %s18, 0
      %p129 = por %p127, %p128
      %p130 = scmp.le.s32.totalorder 1, %s12
      %p131 = scmp.lt.s32.totalorder %s12, 5
      %p132 = pnand %p130, %p131
      %p133 = pneg %p132
      // Predicated region
      $region9: #{ppm_forward.5} parent=5 // pred_check
        _
      $region10: #{ppm_forward.5} parent=5 // pred_check_branch
        %135 = sbr.rel (%p132) target = $region12
      $region11: #{ppm_forward.5} parent=5 // pred_region
        %s136 = ssub.s32 %s12, 1
        // Predicated region
        $region13: #{ppm_forward.5} parent=11 // pred_check
          %p137 = pneg %p73
        $region14: #{ppm_forward.5} parent=11 // pred_check_branch
          %139 = sbr.rel (%p137) target = $region16
        $region15: #{ppm_forward.5} parent=11 // pred_region
          _
        $region16: #{ppm_forward.5} parent=11 // pred_fallthru
          _
        // Predicated region
        $region17: #{ppm_forward.5} parent=11 // pred_check
          %p140 = pneg %p94
        $region18: #{ppm_forward.5} parent=11 // pred_check_branch
          %142 = sbr.rel (%p140) target = $region20
        $region19: #{ppm_forward.5} parent=11 // pred_region
          _
        $region20: #{ppm_forward.5} parent=11 // pred_fallthru
          _
      $region12: #{ppm_forward.5} parent=5 // pred_fallthru
        _
      %p143 = scmp.lt.s32.totalorder %s12, 4
      // Predicated region
      $region21: #{ppm_forward.5} parent=5 // pred_check
        %p144 = pneg %p143
      $region22: #{ppm_forward.5} parent=5 // pred_check_branch
        %146 = sbr.rel (%p144) target = $region24
      $region23: #{ppm_forward.5} parent=5 // pred_region
        // Predicated region
        $region25: #{ppm_forward.5} parent=23 // pred_check
          %p147 = pneg %p46
        $region26: #{ppm_forward.5} parent=23 // pred_check_branch
          %149 = sbr.rel (%p147) target = $region28
        $region27: #{ppm_forward.5} parent=23 // pred_region
          %s150 = smul.u32 16, %s20
          %p151 = scmp.lt.s32.totalorder %s19, 1
          %s152 = scalar_select %p151, %s19, 1
          %p153 = scmp.lt.s32.totalorder %s150, 31
          %s154 = scalar_select %p153, %s150, 31
          %s155 = smul.addr %s152, 32
          %s156 = sadd.s32 %s154, %s155
          %s157 = smul.addr %s156, 8
          %s158 = scalar_lea.vmem %s0, %s157
          %s159 = smul.u32 16, %s20
        $region28: #{ppm_forward.5} parent=23 // pred_fallthru
          _
      $region24: #{ppm_forward.5} parent=5 // pred_fallthru
        _
      %p160 = scmp.le.s32.totalorder 1, %s12
      %p161 = scmp.lt.s32.totalorder %s12, 5
      %p162 = pnand %p160, %p161
      %p163 = pneg %p162
      // Predicated region
      $region29: #{ppm_forward.5} parent=5 // pred_check
        _
      $region30: #{ppm_forward.5} parent=5 // pred_check_branch
        %165 = sbr.rel (%p162) target = $region32
      $region31: #{ppm_forward.5} parent=5 // pred_region
        %s166 = ssub.s32 %s12, 1
        %s167 = smul.u32 16, %s22
        %p168 = scmp.lt.s32.totalorder %s21, 1
        %s169 = scalar_select %p168, %s21, 1
        %p170 = scmp.lt.s32.totalorder %s167, 31
        %s171 = scalar_select %p170, %s167, 31
        %s172 = smul.addr %s169, 32
        %s173 = sadd.s32 %s171, %s172
        %s174 = smul.addr %s173, 8
        %s175 = scalar_lea.vmem %s0, %s174
        %p176 = pneg %p52
        %p177 = pneg %p49
        %p178 = pneg %p73
        %p179 = pneg %p70
        %p180 = pneg %p94
        %p181 = pneg %p91
        %p182 = pneg %p122
        %p183 = pneg %p119
        %s184 = sand.u32 %s109, 1
        %s185 = scalar_lea.sflag [#allocation3], %s184
        %s186 = sand.u32 %s109, 1
        %s187 = smul.addr %s186, 128
        %s188 = scalar_lea.vmem [#allocation2], %s187
        %s189 = smul.u32 16, %s22
        %p190 = scmp.lt.s32.totalorder %s21, 1
        %s191 = scalar_select %p190, %s21, 1
        %p192 = scmp.lt.s32.totalorder %s189, 31
        %s193 = scalar_select %p192, %s189, 31
        %s194 = smul.addr %s191, 32
        %s195 = sadd.s32 %s193, %s194
        %s196 = smul.addr %s195, 8
        %s197 = scalar_lea.vmem %s0, %s196
        %s198 = smul.u32 16, %s22
        %s199 = smul.u32 16, %s22
        %v200 = vld [vmem:[%s197] sm:$0xff]
        %v201 = vld [vmem:[%s197 + $0x8] sm:$0xff]
        %v202 = vld [vmem:[%s197 + $0x10] sm:$0xff]
        %v203 = vld [vmem:[%s197 + $0x18] sm:$0xff]
        %v204 = vld [vmem:[%s197 + $0x20] sm:$0xff]
        %v205 = vld [vmem:[%s197 + $0x28] sm:$0xff]
        %v206 = vld [vmem:[%s197 + $0x30] sm:$0xff]
        %v207 = vld [vmem:[%s197 + $0x38] sm:$0xff]
        %v208 = vld [vmem:[%s197 + $0x40] sm:$0xff]
        %v209 = vld [vmem:[%s197 + $0x48] sm:$0xff]
        %v210 = vld [vmem:[%s197 + $0x50] sm:$0xff]
        %v211 = vld [vmem:[%s197 + $0x58] sm:$0xff]
        %v212 = vld [vmem:[%s197 + $0x60] sm:$0xff]
        %v213 = vld [vmem:[%s197 + $0x68] sm:$0xff]
        %v214 = vld [vmem:[%s197 + $0x70] sm:$0xff]
        %v215 = vld [vmem:[%s197 + $0x78] sm:$0xff]
        %v216 = vld [vmem:[%s1] sm:$0x1]
        %v218 = vlaneseq
        %v219 = vshrl.u32 %v218, 7
        %v220 = vsub.s32 0, %v219
        %v221 = vrot.slane %v216, %v220
        %v223 = vmul.f32 %v200, %v221
        %v224 = vmul.f32 %v201, %v221
        %v225 = vmul.f32 %v202, %v221
        %v226 = vmul.f32 %v203, %v221
        %v227 = vmul.f32 %v204, %v221
        %v228 = vmul.f32 %v205, %v221
        %v229 = vmul.f32 %v206, %v221
        %v230 = vmul.f32 %v207, %v221
        %v231 = vmul.f32 %v208, %v221
        %v232 = vmul.f32 %v209, %v221
        %v233 = vmul.f32 %v210, %v221
        %v234 = vmul.f32 %v211, %v221
        %v235 = vmul.f32 %v212, %v221
        %v236 = vmul.f32 %v213, %v221
        %v237 = vmul.f32 %v214, %v221
        %v238 = vmul.f32 %v215, %v221
        %v239 = vld [vmem:[%s2] sm:$0x1]
        %v241 = vlaneseq
        %v242 = vshrl.u32 %v241, 7
        %v243 = vsub.s32 0, %v242
        %v244 = vrot.slane %v239, %v243
        %v246 = vadd.f32 %v223, %v244
        %v247 = vadd.f32 %v224, %v244
        %v248 = vadd.f32 %v225, %v244
        %v249 = vadd.f32 %v226, %v244
        %v250 = vadd.f32 %v227, %v244
        %v251 = vadd.f32 %v228, %v244
        %v252 = vadd.f32 %v229, %v244
        %v253 = vadd.f32 %v230, %v244
        %v254 = vadd.f32 %v231, %v244
        %v255 = vadd.f32 %v232, %v244
        %v256 = vadd.f32 %v233, %v244
        %v257 = vadd.f32 %v234, %v244
        %v258 = vadd.f32 %v235, %v244
        %v259 = vadd.f32 %v236, %v244
        %v260 = vadd.f32 %v237, %v244
        %v261 = vadd.f32 %v238, %v244
        %v262 = vmax.f32 %v246, 0.0
        %v263 = vmax.f32 %v247, 0.0
        %v264 = vmax.f32 %v248, 0.0
        %v265 = vmax.f32 %v249, 0.0
        %v266 = vmax.f32 %v250, 0.0
        %v267 = vmax.f32 %v251, 0.0
        %v268 = vmax.f32 %v252, 0.0
        %v269 = vmax.f32 %v253, 0.0
        %v270 = vmax.f32 %v254, 0.0
        %v271 = vmax.f32 %v255, 0.0
        %v272 = vmax.f32 %v256, 0.0
        %v273 = vmax.f32 %v257, 0.0
        %v274 = vmax.f32 %v258, 0.0
        %v275 = vmax.f32 %v259, 0.0
        %v276 = vmax.f32 %v260, 0.0
        %v277 = vmax.f32 %v261, 0.0
        %vm278 = vcmask 261120
        %279 = vst.msk [vmem:[%s188] sm:$0xff] %vm278, %v262
        %280 = vst.msk [vmem:[%s188 + $0x8] sm:$0xff] %vm278, %v263
        %281 = vst.msk [vmem:[%s188 + $0x10] sm:$0xff] %vm278, %v264
        %282 = vst.msk [vmem:[%s188 + $0x18] sm:$0xff] %vm278, %v265
        %283 = vst.msk [vmem:[%s188 + $0x20] sm:$0xff] %vm278, %v266
        %284 = vst.msk [vmem:[%s188 + $0x28] sm:$0xff] %vm278, %v267
        %285 = vst.msk [vmem:[%s188 + $0x30] sm:$0xff] %vm278, %v268
        %286 = vst.msk [vmem:[%s188 + $0x38] sm:$0xff] %vm278, %v269
        %287 = vst.msk [vmem:[%s188 + $0x40] sm:$0xff] %vm278, %v270
        %288 = vst.msk [vmem:[%s188 + $0x48] sm:$0xff] %vm278, %v271
        %289 = vst.msk [vmem:[%s188 + $0x50] sm:$0xff] %vm278, %v272
        %290 = vst.msk [vmem:[%s188 + $0x58] sm:$0xff] %vm278, %v273
        %291 = vst.msk [vmem:[%s188 + $0x60] sm:$0xff] %vm278, %v274
        %292 = vst.msk [vmem:[%s188 + $0x68] sm:$0xff] %vm278, %v275
        %293 = vst.msk [vmem:[%s188 + $0x70] sm:$0xff] %vm278, %v276
        %294 = vst.msk [vmem:[%s188 + $0x78] sm:$0xff] %vm278, %v277
        %s295 = sand.u32 %s109, 1
        %s296 = scalar_lea.sflag [#allocation3], %s295
        %s297 = sand.u32 %s109, 1
        %s298 = smul.addr %s297, 128
        %s299 = scalar_lea.vmem [#allocation2], %s298
        // Predicated region
        $region33: #{ppm_forward.5} parent=31 // pred_check
          %p300 = pneg %p119
        $region34: #{ppm_forward.5} parent=31 // pred_check_branch
          %302 = sbr.rel (%p300) target = $region36
        $region35: #{ppm_forward.5} parent=31 // pred_region
          %s303 = smul.u32 16, %s22
          %s305 = ssub.s32 2048, 2048
          %306 = vsyncadd %s296, %s305
          %s307 = smul.addr %s21, 32
          %s308 = sadd.s32 %s303, %s307
          %s309 = smul.addr %s308, 128
          %s310 = scalar_lea.hbm %s3, %s309
          %s311 = sshll.u32 %s299, 4
          %s312 = int_to_ptr.vmem [resolvable:$true] %s311
          %317 = dma.vmem_to_hbm [thread:$0]  %s312, 2048, %s310, %s296, 128, 128, 8
        $region36: #{ppm_forward.5} parent=31 // pred_fallthru
          _
      $region32: #{ppm_forward.5} parent=5 // pred_fallthru
        _
      %p318 = scmp.le.s32.totalorder 2, %s12
      // Predicated region
      $region37: #{ppm_forward.5} parent=5 // pred_check
        %p319 = pneg %p318
      $region38: #{ppm_forward.5} parent=5 // pred_check_branch
        %321 = sbr.rel (%p319) target = $region40
      $region39: #{ppm_forward.5} parent=5 // pred_region
        %s322 = ssub.s32 %s12, 2
        // Predicated region
        $region41: #{ppm_forward.5} parent=39 // pred_check
          %p323 = pneg %p125
        $region42: #{ppm_forward.5} parent=39 // pred_check_branch
          %325 = sbr.rel (%p323) target = $region44
        $region43: #{ppm_forward.5} parent=39 // pred_region
          %s326 = sand.u32 %s110, 1
          %s327 = scalar_lea.sflag [#allocation3], %s326
          %s328 = sand.u32 %s110, 1
          %s329 = smul.addr %s328, 128
          %s330 = scalar_lea.vmem [#allocation2], %s329
          %331 = dma.done %s327, 2048
        $region44: #{ppm_forward.5} parent=39 // pred_fallthru
          _
      $region40: #{ppm_forward.5} parent=5 // pred_fallthru
        _
    $region6: #{ppm_forward.5} parent=1 // loop_footer
      %s16 = sadd.s32 1, %s12
    $region7: #{ppm_forward.5} parent=1 // loop_footer_branch
      %11 = sbr.rel target = $region3
    $region8: #{ppm_forward.5} parent=1 // loop_exit
      _
    %332 = vsyncpa [#allocation3], 1
    %s333 = scalar_lea.sflag [#allocation3], 1
    %334 = vsyncpa %s333, 1

</llo_original>
